<compile_context>
chip_gen: v7x
topology: tpu7x:2x2x1
jax: 0.10.0
libtpu: 0.0.40
codegen_flags: <defaults>
</compile_context>

<pallas_src>
import jax
import jax.numpy as jnp
from jax.experimental import pallas as pl
from jax.experimental.pallas import tpu as pltpu

OUT_LANES = 128  # lane-dense output block width (mu in lanes [0,F), sigma in [F,2F))


def _round_up(x, m):
    return (x + m - 1) // m * m


def _leaky_relu(x, slope=0.01):
    return jnp.where(x >= 0, x, slope * x)


def _softplus_torch(x):
    # PyTorch nn.Softplus(beta=1, threshold=20)
    return jnp.where(x > 20.0, x, jnp.log1p(jnp.exp(jnp.minimum(x, 20.0))))


def market_factor_kernel(e_ref, wkv_ref, wbig_ref, vec_ref, sel_ref, selt_ref, out_ref):
    """One batch tile of the full forward pass.

    Shapes (F = num_market_factor, H = H_market, FH = F*H, BT = batch tile):
      e_ref    (F, BT, H)            market features, data-row-major
      wkv_ref  (H, 2*FH)             [ W_k | W_v ] packed per head, (in, out) layout
      wbig_ref (FH, FH + 128)        [ blockdiag(Wh^T) | W_out_pad ]
      vec_ref  (8, max(2FH,128))     row0 b_kv, row1 q packed, row2 ||q_h||,
                                     row3 tiled b_h, row4 padded [b_mu | b_sigma]
      sel_ref  (FH, F)               0/1 head selector (sel[h*H+d, h] = 1)
      selt_ref (F, FH)               its transpose (per-head scalar -> head lanes)
      out_ref  (BT, 128)             lanes [0,F) = mu, lanes [F,2F) = sigma
    """
    F, BT, H = e_ref.shape
    FH = F * H
    eps = jnp.float32(jnp.finfo(jnp.float32).eps)

    w_kv = wkv_ref[...]                       # (H, 2FH)
    w_h = wbig_ref[:, 0:FH]                   # (FH, FH)  blockdiag(Wh^T), 128-aligned
    w_out = wbig_ref[:, FH:FH + OUT_LANES]    # (FH, 128) padded mu/sigma head
    b_kv = vec_ref[0:1, 0:2 * FH]             # (1, 2FH)
    q_all = vec_ref[1:2, 0:FH]                # (1, FH)  head h at lanes [h*H,(h+1)*H)
    q_norm = vec_ref[2:3, 0:F]                # (1, F)   precomputed ||q_h||
    b_h = vec_ref[3:4, 0:FH]                  # (1, FH)  b_h tiled per head
    b_out = vec_ref[4:5, 0:OUT_LANES]         # (1, 128)
    sel = sel_ref[...]                        # (FH, F)
    sel_t = selt_ref[...]                     # (F, FH)

    num = jnp.zeros((BT, FH), jnp.float32)    # softmax-weighted values, per head chunk
    den = jnp.zeros((BT, F), jnp.float32)     # softmax denominators, per head

    # Static loop over the F data rows of each sample: the per-sample softmax over
    # data rows becomes elementwise accumulation across these F passes.
    for f in range(F):
        e_f = e_ref[f]                                                       # (BT, H)
        kv = jnp.dot(e_f, w_kv, preferred_element_type=jnp.float32) + b_kv   # (BT, 2FH)
        k_f = kv[:, 0:FH]
        v_f = kv[:, FH:2 * FH]
        # Per-head ||k||^2 and q.k via the MXU against the 0/1 selector.
        ksq = jnp.dot(k_f * k_f, sel, preferred_element_type=jnp.float32)    # (BT, F)
        kq = jnp.dot(k_f * q_all, sel, preferred_element_type=jnp.float32)   # (BT, F)
        scale = jnp.maximum(q_norm * jnp.sqrt(ksq), eps)
        att = _leaky_relu(kq / scale)
        # |att| <= 1 (cosine-scaled, then leaky-relu) so exp() never overflows and the
        # max-subtraction of the reference softmax is mathematically redundant here.
        p = jnp.exp(att)                                                     # (BT, F)
        num = num + jnp.dot(p, sel_t, preferred_element_type=jnp.float32) * v_f
        den = den + p

    den_rep = jnp.dot(den, sel_t, preferred_element_type=jnp.float32)        # (BT, FH)
    h_flat = num / den_rep                                                   # h_multi, heads packed on lanes

    hidden = jnp.dot(h_flat, w_h, preferred_element_type=jnp.float32) + b_h  # (BT, FH)
    hidden = _leaky_relu(hidden)

    raw = jnp.dot(hidden, w_out, preferred_element_type=jnp.float32) + b_out  # (BT, 128)
    sp = _softplus_torch(raw)
    col = jax.lax.broadcasted_iota(jnp.int32, raw.shape, 1)
    out_ref[...] = jnp.where(col < F, raw, jnp.where(col < 2 * F, sp, 0.0))


def market_factor_predictor(e, packed, *, b_tile=512):
    """e: (F, H) single sample (module signature) or (B, F, H) batch.

    Returns (mu, sigma) of shape (F,) / (B, F).
    b_tile: samples per grid step.  ~512-2048 on v7x (64 MiB VMEM), up to 4-8K on
    v5e/v6e (raise pltpu.CompilerParams(vmem_limit_bytes=...) if pushed that far).
    """
    single = e.ndim == 2
    if single:
        e = e[None]
    B, F, H = e.shape
    FH = F * H

    b_tile = _round_up(max(8, min(b_tile, _round_up(B, 8))), 8)
    b_pad = _round_up(B, b_tile)

    e_t = jnp.transpose(e, (1, 0, 2))                       # (F, B, H) - layout plumbing
    if b_pad != B:
        e_t = jnp.pad(e_t, ((0, 0), (0, b_pad - B), (0, 0)))

    grid = (b_pad // b_tile,)
    out = pl.pallas_call(
        market_factor_kernel,
        out_shape=jax.ShapeDtypeStruct((b_pad, OUT_LANES), jnp.float32),
        grid=grid,
        in_specs=[
            pl.BlockSpec((F, b_tile, H), lambda i: (0, i, 0)),        # batch-tiled input
            pl.BlockSpec(packed["w_kv"].shape, lambda i: (0, 0)),     # resident weights
            pl.BlockSpec(packed["w_big"].shape, lambda i: (0, 0)),
            pl.BlockSpec(packed["vec"].shape, lambda i: (0, 0)),
            pl.BlockSpec(packed["sel"].shape, lambda i: (0, 0)),
            pl.BlockSpec(packed["sel_t"].shape, lambda i: (0, 0)),
        ],
        out_specs=pl.BlockSpec((b_tile, OUT_LANES), lambda i: (i, 0)),
        compiler_params=pltpu.CompilerParams(
            dimension_semantics=("parallel",)),
    )(e_t, packed["w_kv"], packed["w_big"], packed["vec"],
      packed["sel"], packed["sel_t"])

    mu = out[:B, 0:F]
    sigma = out[:B, F:2 * F]
    if single:
        return mu[0], sigma[0]
    return mu, sigma


def init_params(key, F, H):
    """Deterministic synthetic parameters matching the PyTorch module's shapes
    (torch layout: Linear weights are (out, in))."""
    keys = jax.random.split(key, 8)
    bound = 1.0 / jnp.sqrt(jnp.float32(H))

    def uni(k, shape, lo, hi):
        return jax.random.uniform(k, shape, jnp.float32, lo, hi)

    q = uni(keys[0], (F, H), 0.0, 1.0)                 # torch.rand(C) per head
    wk = uni(keys[1], (F, H, H), -bound, bound)        # (out, in)
    bk = uni(keys[2], (F, H), -bound, bound)
    wv = uni(keys[3], (F, H, H), -bound, bound)
    bv = uni(keys[4], (F, H), -bound, bound)

    k5 = jax.random.split(keys[5], 2)
    wh = uni(k5[0], (H, H), -bound, bound)
    bh = uni(k5[1], (H,), -bound, bound)
    k6 = jax.random.split(keys[6], 2)
    wmu = uni(k6[0], (1, H), -bound, bound)
    bmu = uni(k6[1], (1,), -bound, bound)
    k7 = jax.random.split(keys[7], 2)
    ws = uni(k7[0], (1, H), -bound, bound)
    bs = uni(k7[1], (1,), -bound, bound)

    return {"q": q, "wk": wk, "bk": bk, "wv": wv, "bv": bv,
            "wh": wh, "bh": bh, "wmu": wmu, "bmu": bmu, "ws": ws, "bs": bs}


def pack_params(p, F, H):
    """Pack the per-head parameters into a few VMEM-resident, 128-lane-aligned slabs."""
    FH = F * H
    assert OUT_LANES >= 2 * F

    # column h*H+o of the k-part = Wk_h[o, :]  ==>  e @ W_kv == e @ Wk_h.T per head
    wk_packed = jnp.transpose(p["wk"], (2, 0, 1)).reshape(H, FH)
    wv_packed = jnp.transpose(p["wv"], (2, 0, 1)).reshape(H, FH)
    w_kv = jnp.concatenate([wk_packed, wv_packed], axis=1)               # (H, 2FH)

    # blockdiag(Wh^T): each head chunk gets the same (H,H) linear
    wh_bd = jnp.kron(jnp.eye(F, dtype=jnp.float32), p["wh"].T)           # (FH, FH)

    # padded mu/sigma head: col h -> wmu over head-h rows, col F+h -> ws, rest zero
    w_out = jnp.zeros((FH, OUT_LANES), jnp.float32)
    for h in range(F):
        w_out = w_out.at[h * H:(h + 1) * H, h].set(p["wmu"][0])
        w_out = w_out.at[h * H:(h + 1) * H, F + h].set(p["ws"][0])
    w_big = jnp.concatenate([wh_bd, w_out], axis=1)                      # (FH, FH+128)

    b_kv = jnp.concatenate([p["bk"].reshape(FH), p["bv"].reshape(FH)])   # (2FH,)
    q_all = p["q"].reshape(FH)                                           # (FH,)
    q_norm = jnp.sqrt(jnp.sum(p["q"] * p["q"], axis=1))                  # (F,)
    b_h_rep = jnp.tile(p["bh"], F)                                       # (FH,)
    b_out = jnp.zeros((OUT_LANES,), jnp.float32)
    b_out = b_out.at[0:F].set(p["bmu"][0])
    b_out = b_out.at[F:2 * F].set(p["bs"][0])

    width = max(2 * FH, OUT_LANES)
    vec = jnp.zeros((8, width), jnp.float32)
    vec = vec.at[0, :2 * FH].set(b_kv)
    vec = vec.at[1, :FH].set(q_all)
    vec = vec.at[2, :F].set(q_norm)
    vec = vec.at[3, :FH].set(b_h_rep)
    vec = vec.at[4, :OUT_LANES].set(b_out)

    head_of_lane = jnp.arange(FH) // H
    sel = (head_of_lane[:, None] == jnp.arange(F)[None, :]).astype(jnp.float32)  # (FH, F)
    sel_t = sel.T                                                                 # (F, FH)

    return {"w_kv": w_kv, "w_big": w_big, "vec": vec, "sel": sel, "sel_t": sel_t}


def reference(e, p):
    """Pure-JAX reference mirroring the PyTorch forward (single sample or batch)."""
    single = e.ndim == 2
    if single:
        e = e[None]
    eps = jnp.finfo(jnp.float32).eps
    F = p["q"].shape[0]
    hm = []
    for h in range(F):
        q = p["q"][h]
        k = jnp.einsum("bfd,od->bfo", e, p["wk"][h]) + p["bk"][h]
        v = jnp.einsum("bfd,od->bfo", e, p["wv"][h]) + p["bv"][h]
        scale = jnp.maximum(jnp.linalg.norm(q) * jnp.linalg.norm(k, axis=-1), eps)
        att = jnp.einsum("bfo,o->bf", k, q) / scale
        att = jnp.where(att >= 0, att, 0.01 * att)
        att = jax.nn.softmax(att, axis=-1)
        hm.append(jnp.einsum("bf,bfo->bo", att, v))
    hm = jnp.stack(hm, axis=1)                                      # (B, F, H)
    hid = jnp.einsum("bfd,od->bfo", hm, p["wh"]) + p["bh"]
    hid = jnp.where(hid >= 0, hid, 0.01 * hid)
    mu = jnp.einsum("bfd,d->bf", hid, p["wmu"][0]) + p["bmu"][0]
    sg = jax.nn.softplus(jnp.einsum("bfd,d->bf", hid, p["ws"][0]) + p["bs"][0])
    if single:
        return mu[0], sg[0]
    return mu, sg


if __name__ == "__main__":
    num_market_factor = 4   # F
    H_market = 32           # H

    key = jax.random.PRNGKey(0)
    k_e, k_p, k_b = jax.random.split(key, 3)
    params = init_params(k_p, num_market_factor, H_market)
    packed = pack_params(params, num_market_factor, H_market)

    # --- single-sample path (the PyTorch module's forward signature) ------------
    e1 = jax.random.normal(k_e, (num_market_factor, H_market), jnp.float32)
    mu1, sg1 = market_factor_predictor(e1, packed, b_tile=8)
    jax.block_until_ready((mu1, sg1))
    mu1_ref, sg1_ref = reference(e1, params)
    assert mu1.shape == (num_market_factor,) and sg1.shape == (num_market_factor,)
    assert jnp.allclose(mu1, mu1_ref, rtol=2e-4, atol=2e-5), (mu1, mu1_ref)
    assert jnp.allclose(sg1, sg1_ref, rtol=2e-4, atol=2e-5), (sg1, sg1_ref)

    # --- batched path (grid over batch tiles; exercises padding + residency) ----
    B = 96
    eb = jax.random.normal(k_b, (B, num_market_factor, H_market), jnp.float32)
    mub, sgb = market_factor_predictor(eb, packed, b_tile=64)
    jax.block_until_ready((mub, sgb))
    mub_ref, sgb_ref = reference(eb, params)
    assert mub.shape == (B, num_market_factor) and sgb.shape == (B, num_market_factor)
    assert jnp.allclose(mub, mub_ref, rtol=2e-4, atol=2e-5)
    assert jnp.allclose(sgb, sgb_ref, rtol=2e-4, atol=2e-5)

    print("KERNEL_OK")
</pallas_src>

<mosaic_0001>
module attributes {stable_mosaic.version = 11 : i64} {
  func.func @market_factor_kernel(%arg0: i32, %arg1: memref<4x8x32xf32, #tpu.memory_space<vmem>>, %arg2: memref<32x256xf32, #tpu.memory_space<vmem>>, %arg3: memref<128x256xf32, #tpu.memory_space<vmem>>, %arg4: memref<8x256xf32, #tpu.memory_space<vmem>>, %arg5: memref<128x4xf32, #tpu.memory_space<vmem>>, %arg6: memref<4x128xf32, #tpu.memory_space<vmem>>, %arg7: memref<8x128xf32, #tpu.memory_space<vmem>>) attributes {dimension_semantics = [#tpu.dimension_semantics<parallel>], iteration_bounds = array<i64: 1>, scalar_prefetch = 0 : i64, scratch_operands = 0 : i64, tpu.core_type = #tpu.core_type<tc>, window_params = [{transform_indices = @transform_0, window_bounds = array<i64: 4, 8, 32>}, {pipeline_mode = #tpu.pipeline_mode<synchronous>, transform_indices = @transform_1, window_bounds = array<i64: 32, 256>}, {pipeline_mode = #tpu.pipeline_mode<synchronous>, transform_indices = @transform_2, window_bounds = array<i64: 128, 256>}, {pipeline_mode = #tpu.pipeline_mode<synchronous>, transform_indices = @transform_3, window_bounds = array<i64: 8, 256>}, {pipeline_mode = #tpu.pipeline_mode<synchronous>, transform_indices = @transform_4, window_bounds = array<i64: 128, 4>}, {pipeline_mode = #tpu.pipeline_mode<synchronous>, transform_indices = @transform_5, window_bounds = array<i64: 4, 128>}, {transform_indices = @transform_6, window_bounds = array<i64: 8, 128>}]} {
    %c0 = arith.constant 0 : index
    %c0_0 = arith.constant 0 : index
    %0 = vector.load %arg2[%c0, %c0_0] : memref<32x256xf32, #tpu.memory_space<vmem>>, vector<32x256xf32>
    %c0_1 = arith.constant 0 : index
    %c0_2 = arith.constant 0 : index
    %1 = vector.load %arg3[%c0_1, %c0_2] : memref<128x256xf32, #tpu.memory_space<vmem>>, vector<128x128xf32>
    %c0_3 = arith.constant 0 : index
    %c128 = arith.constant 128 : index
    %2 = vector.load %arg3[%c0_3, %c128] : memref<128x256xf32, #tpu.memory_space<vmem>>, vector<128x128xf32>
    %c0_4 = arith.constant 0 : index
    %c0_5 = arith.constant 0 : index
    %3 = vector.load %arg4[%c0_4, %c0_5] : memref<8x256xf32, #tpu.memory_space<vmem>>, vector<1x256xf32>
    %c1 = arith.constant 1 : index
    %c0_6 = arith.constant 0 : index
    %4 = vector.load %arg4[%c1, %c0_6] : memref<8x256xf32, #tpu.memory_space<vmem>>, vector<1x128xf32>
    %c2 = arith.constant 2 : index
    %c0_7 = arith.constant 0 : index
    %5 = vector.load %arg4[%c2, %c0_7] : memref<8x256xf32, #tpu.memory_space<vmem>>, vector<1x4xf32>
    %c3 = arith.constant 3 : index
    %c0_8 = arith.constant 0 : index
    %6 = vector.load %arg4[%c3, %c0_8] : memref<8x256xf32, #tpu.memory_space<vmem>>, vector<1x128xf32>
    %c4 = arith.constant 4 : index
    %c0_9 = arith.constant 0 : index
    %7 = vector.load %arg4[%c4, %c0_9] : memref<8x256xf32, #tpu.memory_space<vmem>>, vector<1x128xf32>
    %c0_10 = arith.constant 0 : index
    %c0_11 = arith.constant 0 : index
    %8 = vector.load %arg5[%c0_10, %c0_11] : memref<128x4xf32, #tpu.memory_space<vmem>>, vector<128x4xf32>
    %c0_12 = arith.constant 0 : index
    %c0_13 = arith.constant 0 : index
    %9 = vector.load %arg6[%c0_12, %c0_13] : memref<4x128xf32, #tpu.memory_space<vmem>>, vector<4x128xf32>
    %cst = arith.constant 0.000000e+00 : f32
    %10 = vector.broadcast %cst : f32 to vector<8x128xf32>
    %cst_14 = arith.constant 0.000000e+00 : f32
    %11 = vector.broadcast %cst_14 : f32 to vector<8x4xf32>
    %c0_15 = arith.constant 0 : index
    %c0_16 = arith.constant 0 : index
    %c0_17 = arith.constant 0 : index
    %12 = vector.load %arg1[%c0_15, %c0_16, %c0_17] : memref<4x8x32xf32, #tpu.memory_space<vmem>>, vector<1x8x32xf32>
    %13 = vector.shape_cast %12 : vector<1x8x32xf32> to vector<8x32xf32>
    %cst_18 = arith.constant dense<0.000000e+00> : vector<8x256xf32>
    %14 = tpu.matmul %13, %0, %cst_18 {dimension_numbers = #tpu.dot_dimension_numbers<[1], [0], [0], [1], [0, 0, 1, 1], [], []>} : vector<8x32xf32>, vector<32x256xf32>, vector<8x256xf32> -> vector<8x256xf32>
    %15 = vector.broadcast %3 : vector<1x256xf32> to vector<8x256xf32>
    %16 = arith.addf %14, %15 : vector<8x256xf32>
    %17 = vector.extract_strided_slice %16 {offsets = [0, 0], sizes = [8, 128], strides = [1, 1]} : vector<8x256xf32> to vector<8x128xf32>
    %18 = vector.extract_strided_slice %16 {offsets = [0, 128], sizes = [8, 128], strides = [1, 1]} : vector<8x256xf32> to vector<8x128xf32>
    %19 = arith.mulf %17, %17 : vector<8x128xf32>
    %cst_19 = arith.constant dense<0.000000e+00> : vector<8x4xf32>
    %20 = tpu.matmul %19, %8, %cst_19 {dimension_numbers = #tpu.dot_dimension_numbers<[1], [0], [0], [1], [0, 0, 1, 1], [], []>} : vector<8x128xf32>, vector<128x4xf32>, vector<8x4xf32> -> vector<8x4xf32>
    %21 = vector.broadcast %4 : vector<1x128xf32> to vector<8x128xf32>
    %22 = arith.mulf %17, %21 : vector<8x128xf32>
    %cst_20 = arith.constant dense<0.000000e+00> : vector<8x4xf32>
    %23 = tpu.matmul %22, %8, %cst_20 {dimension_numbers = #tpu.dot_dimension_numbers<[1], [0], [0], [1], [0, 0, 1, 1], [], []>} : vector<8x128xf32>, vector<128x4xf32>, vector<8x4xf32> -> vector<8x4xf32>
    %24 = math.sqrt %20 : vector<8x4xf32>
    %25 = vector.broadcast %5 : vector<1x4xf32> to vector<8x4xf32>
    %26 = arith.mulf %25, %24 : vector<8x4xf32>
    %cst_21 = arith.constant 1.1920929E-7 : f32
    %27 = vector.broadcast %cst_21 : f32 to vector<8x4xf32>
    %28 = arith.maximumf %26, %27 : vector<8x4xf32>
    %29 = arith.divf %23, %28 : vector<8x4xf32>
    %cst_22 = arith.constant 0.000000e+00 : f32
    %30 = vector.broadcast %cst_22 : f32 to vector<8x4xf32>
    %31 = arith.cmpf oge, %29, %30 : vector<8x4xf32>
    %cst_23 = arith.constant 0.00999999977 : f32
    %32 = vector.broadcast %cst_23 : f32 to vector<8x4xf32>
    %33 = arith.mulf %32, %29 : vector<8x4xf32>
    %34 = arith.select %31, %29, %33 : vector<8x4xi1>, vector<8x4xf32>
    %35 = math.exp %34 : vector<8x4xf32>
    %cst_24 = arith.constant dense<0.000000e+00> : vector<8x128xf32>
    %36 = tpu.matmul %35, %9, %cst_24 {dimension_numbers = #tpu.dot_dimension_numbers<[1], [0], [0], [1], [0, 0, 1, 1], [], []>} : vector<8x4xf32>, vector<4x128xf32>, vector<8x128xf32> -> vector<8x128xf32>
    %37 = arith.mulf %36, %18 : vector<8x128xf32>
    %38 = arith.addf %10, %37 : vector<8x128xf32>
    %39 = arith.addf %11, %35 : vector<8x4xf32>
    %c1_25 = arith.constant 1 : index
    %c0_26 = arith.constant 0 : index
    %c0_27 = arith.constant 0 : index
    %40 = vector.load %arg1[%c1_25, %c0_26, %c0_27] : memref<4x8x32xf32, #tpu.memory_space<vmem>>, vector<1x8x32xf32>
    %41 = vector.shape_cast %40 : vector<1x8x32xf32> to vector<8x32xf32>
    %cst_28 = arith.constant dense<0.000000e+00> : vector<8x256xf32>
    %42 = tpu.matmul %41, %0, %cst_28 {dimension_numbers = #tpu.dot_dimension_numbers<[1], [0], [0], [1], [0, 0, 1, 1], [], []>} : vector<8x32xf32>, vector<32x256xf32>, vector<8x256xf32> -> vector<8x256xf32>
    %43 = vector.broadcast %3 : vector<1x256xf32> to vector<8x256xf32>
    %44 = arith.addf %42, %43 : vector<8x256xf32>
    %45 = vector.extract_strided_slice %44 {offsets = [0, 0], sizes = [8, 128], strides = [1, 1]} : vector<8x256xf32> to vector<8x128xf32>
    %46 = vector.extract_strided_slice %44 {offsets = [0, 128], sizes = [8, 128], strides = [1, 1]} : vector<8x256xf32> to vector<8x128xf32>
    %47 = arith.mulf %45, %45 : vector<8x128xf32>
    %cst_29 = arith.constant dense<0.000000e+00> : vector<8x4xf32>
    %48 = tpu.matmul %47, %8, %cst_29 {dimension_numbers = #tpu.dot_dimension_numbers<[1], [0], [0], [1], [0, 0, 1, 1], [], []>} : vector<8x128xf32>, vector<128x4xf32>, vector<8x4xf32> -> vector<8x4xf32>
    %49 = vector.broadcast %4 : vector<1x128xf32> to vector<8x128xf32>
    %50 = arith.mulf %45, %49 : vector<8x128xf32>
    %cst_30 = arith.constant dense<0.000000e+00> : vector<8x4xf32>
    %51 = tpu.matmul %50, %8, %cst_30 {dimension_numbers = #tpu.dot_dimension_numbers<[1], [0], [0], [1], [0, 0, 1, 1], [], []>} : vector<8x128xf32>, vector<128x4xf32>, vector<8x4xf32> -> vector<8x4xf32>
    %52 = math.sqrt %48 : vector<8x4xf32>
    %53 = vector.broadcast %5 : vector<1x4xf32> to vector<8x4xf32>
    %54 = arith.mulf %53, %52 : vector<8x4xf32>
    %cst_31 = arith.constant 1.1920929E-7 : f32
    %55 = vector.broadcast %cst_31 : f32 to vector<8x4xf32>
    %56 = arith.maximumf %54, %55 : vector<8x4xf32>
    %57 = arith.divf %51, %56 : vector<8x4xf32>
    %cst_32 = arith.constant 0.000000e+00 : f32
    %58 = vector.broadcast %cst_32 : f32 to vector<8x4xf32>
    %59 = arith.cmpf oge, %57, %58 : vector<8x4xf32>
    %cst_33 = arith.constant 0.00999999977 : f32
    %60 = vector.broadcast %cst_33 : f32 to vector<8x4xf32>
    %61 = arith.mulf %60, %57 : vector<8x4xf32>
    %62 = arith.select %59, %57, %61 : vector<8x4xi1>, vector<8x4xf32>
    %63 = math.exp %62 : vector<8x4xf32>
    %cst_34 = arith.constant dense<0.000000e+00> : vector<8x128xf32>
    %64 = tpu.matmul %63, %9, %cst_34 {dimension_numbers = #tpu.dot_dimension_numbers<[1], [0], [0], [1], [0, 0, 1, 1], [], []>} : vector<8x4xf32>, vector<4x128xf32>, vector<8x128xf32> -> vector<8x128xf32>
    %65 = arith.mulf %64, %46 : vector<8x128xf32>
    %66 = arith.addf %38, %65 : vector<8x128xf32>
    %67 = arith.addf %39, %63 : vector<8x4xf32>
    %c2_35 = arith.constant 2 : index
    %c0_36 = arith.constant 0 : index
    %c0_37 = arith.constant 0 : index
    %68 = vector.load %arg1[%c2_35, %c0_36, %c0_37] : memref<4x8x32xf32, #tpu.memory_space<vmem>>, vector<1x8x32xf32>
    %69 = vector.shape_cast %68 : vector<1x8x32xf32> to vector<8x32xf32>
    %cst_38 = arith.constant dense<0.000000e+00> : vector<8x256xf32>
    %70 = tpu.matmul %69, %0, %cst_38 {dimension_numbers = #tpu.dot_dimension_numbers<[1], [0], [0], [1], [0, 0, 1, 1], [], []>} : vector<8x32xf32>, vector<32x256xf32>, vector<8x256xf32> -> vector<8x256xf32>
    %71 = vector.broadcast %3 : vector<1x256xf32> to vector<8x256xf32>
    %72 = arith.addf %70, %71 : vector<8x256xf32>
    %73 = vector.extract_strided_slice %72 {offsets = [0, 0], sizes = [8, 128], strides = [1, 1]} : vector<8x256xf32> to vector<8x128xf32>
    %74 = vector.extract_strided_slice %72 {offsets = [0, 128], sizes = [8, 128], strides = [1, 1]} : vector<8x256xf32> to vector<8x128xf32>
    %75 = arith.mulf %73, %73 : vector<8x128xf32>
    %cst_39 = arith.constant dense<0.000000e+00> : vector<8x4xf32>
    %76 = tpu.matmul %75, %8, %cst_39 {dimension_numbers = #tpu.dot_dimension_numbers<[1], [0], [0], [1], [0, 0, 1, 1], [], []>} : vector<8x128xf32>, vector<128x4xf32>, vector<8x4xf32> -> vector<8x4xf32>
    %77 = vector.broadcast %4 : vector<1x128xf32> to vector<8x128xf32>
    %78 = arith.mulf %73, %77 : vector<8x128xf32>
    %cst_40 = arith.constant dense<0.000000e+00> : vector<8x4xf32>
    %79 = tpu.matmul %78, %8, %cst_40 {dimension_numbers = #tpu.dot_dimension_numbers<[1], [0], [0], [1], [0, 0, 1, 1], [], []>} : vector<8x128xf32>, vector<128x4xf32>, vector<8x4xf32> -> vector<8x4xf32>
    %80 = math.sqrt %76 : vector<8x4xf32>
    %81 = vector.broadcast %5 : vector<1x4xf32> to vector<8x4xf32>
    %82 = arith.mulf %81, %80 : vector<8x4xf32>
    %cst_41 = arith.constant 1.1920929E-7 : f32
    %83 = vector.broadcast %cst_41 : f32 to vector<8x4xf32>
    %84 = arith.maximumf %82, %83 : vector<8x4xf32>
    %85 = arith.divf %79, %84 : vector<8x4xf32>
    %cst_42 = arith.constant 0.000000e+00 : f32
    %86 = vector.broadcast %cst_42 : f32 to vector<8x4xf32>
    %87 = arith.cmpf oge, %85, %86 : vector<8x4xf32>
    %cst_43 = arith.constant 0.00999999977 : f32
    %88 = vector.broadcast %cst_43 : f32 to vector<8x4xf32>
    %89 = arith.mulf %88, %85 : vector<8x4xf32>
    %90 = arith.select %87, %85, %89 : vector<8x4xi1>, vector<8x4xf32>
    %91 = math.exp %90 : vector<8x4xf32>
    %cst_44 = arith.constant dense<0.000000e+00> : vector<8x128xf32>
    %92 = tpu.matmul %91, %9, %cst_44 {dimension_numbers = #tpu.dot_dimension_numbers<[1], [0], [0], [1], [0, 0, 1, 1], [], []>} : vector<8x4xf32>, vector<4x128xf32>, vector<8x128xf32> -> vector<8x128xf32>
    %93 = arith.mulf %92, %74 : vector<8x128xf32>
    %94 = arith.addf %66, %93 : vector<8x128xf32>
    %95 = arith.addf %67, %91 : vector<8x4xf32>
    %c3_45 = arith.constant 3 : index
    %c0_46 = arith.constant 0 : index
    %c0_47 = arith.constant 0 : index
    %96 = vector.load %arg1[%c3_45, %c0_46, %c0_47] : memref<4x8x32xf32, #tpu.memory_space<vmem>>, vector<1x8x32xf32>
    %97 = vector.shape_cast %96 : vector<1x8x32xf32> to vector<8x32xf32>
    %cst_48 = arith.constant dense<0.000000e+00> : vector<8x256xf32>
    %98 = tpu.matmul %97, %0, %cst_48 {dimension_numbers = #tpu.dot_dimension_numbers<[1], [0], [0], [1], [0, 0, 1, 1], [], []>} : vector<8x32xf32>, vector<32x256xf32>, vector<8x256xf32> -> vector<8x256xf32>
    %99 = vector.broadcast %3 : vector<1x256xf32> to vector<8x256xf32>
    %100 = arith.addf %98, %99 : vector<8x256xf32>
    %101 = vector.extract_strided_slice %100 {offsets = [0, 0], sizes = [8, 128], strides = [1, 1]} : vector<8x256xf32> to vector<8x128xf32>
    %102 = vector.extract_strided_slice %100 {offsets = [0, 128], sizes = [8, 128], strides = [1, 1]} : vector<8x256xf32> to vector<8x128xf32>
    %103 = arith.mulf %101, %101 : vector<8x128xf32>
    %cst_49 = arith.constant dense<0.000000e+00> : vector<8x4xf32>
    %104 = tpu.matmul %103, %8, %cst_49 {dimension_numbers = #tpu.dot_dimension_numbers<[1], [0], [0], [1], [0, 0, 1, 1], [], []>} : vector<8x128xf32>, vector<128x4xf32>, vector<8x4xf32> -> vector<8x4xf32>
    %105 = vector.broadcast %4 : vector<1x128xf32> to vector<8x128xf32>
    %106 = arith.mulf %101, %105 : vector<8x128xf32>
    %cst_50 = arith.constant dense<0.000000e+00> : vector<8x4xf32>
    %107 = tpu.matmul %106, %8, %cst_50 {dimension_numbers = #tpu.dot_dimension_numbers<[1], [0], [0], [1], [0, 0, 1, 1], [], []>} : vector<8x128xf32>, vector<128x4xf32>, vector<8x4xf32> -> vector<8x4xf32>
    %108 = math.sqrt %104 : vector<8x4xf32>
    %109 = vector.broadcast %5 : vector<1x4xf32> to vector<8x4xf32>
    %110 = arith.mulf %109, %108 : vector<8x4xf32>
    %cst_51 = arith.constant 1.1920929E-7 : f32
    %111 = vector.broadcast %cst_51 : f32 to vector<8x4xf32>
    %112 = arith.maximumf %110, %111 : vector<8x4xf32>
    %113 = arith.divf %107, %112 : vector<8x4xf32>
    %cst_52 = arith.constant 0.000000e+00 : f32
    %114 = vector.broadcast %cst_52 : f32 to vector<8x4xf32>
    %115 = arith.cmpf oge, %113, %114 : vector<8x4xf32>
    %cst_53 = arith.constant 0.00999999977 : f32
    %116 = vector.broadcast %cst_53 : f32 to vector<8x4xf32>
    %117 = arith.mulf %116, %113 : vector<8x4xf32>
    %118 = arith.select %115, %113, %117 : vector<8x4xi1>, vector<8x4xf32>
    %119 = math.exp %118 : vector<8x4xf32>
    %cst_54 = arith.constant dense<0.000000e+00> : vector<8x128xf32>
    %120 = tpu.matmul %119, %9, %cst_54 {dimension_numbers = #tpu.dot_dimension_numbers<[1], [0], [0], [1], [0, 0, 1, 1], [], []>} : vector<8x4xf32>, vector<4x128xf32>, vector<8x128xf32> -> vector<8x128xf32>
    %121 = arith.mulf %120, %102 : vector<8x128xf32>
    %122 = arith.addf %94, %121 : vector<8x128xf32>
    %123 = arith.addf %95, %119 : vector<8x4xf32>
    %cst_55 = arith.constant dense<0.000000e+00> : vector<8x128xf32>
    %124 = tpu.matmul %123, %9, %cst_55 {dimension_numbers = #tpu.dot_dimension_numbers<[1], [0], [0], [1], [0, 0, 1, 1], [], []>} : vector<8x4xf32>, vector<4x128xf32>, vector<8x128xf32> -> vector<8x128xf32>
    %125 = arith.divf %122, %124 : vector<8x128xf32>
    %cst_56 = arith.constant dense<0.000000e+00> : vector<8x128xf32>
    %126 = tpu.matmul %125, %1, %cst_56 {dimension_numbers = #tpu.dot_dimension_numbers<[1], [0], [0], [1], [0, 0, 1, 1], [], []>} : vector<8x128xf32>, vector<128x128xf32>, vector<8x128xf32> -> vector<8x128xf32>
    %127 = vector.broadcast %6 : vector<1x128xf32> to vector<8x128xf32>
    %128 = arith.addf %126, %127 : vector<8x128xf32>
    %cst_57 = arith.constant 0.000000e+00 : f32
    %129 = vector.broadcast %cst_57 : f32 to vector<8x128xf32>
    %130 = arith.cmpf oge, %128, %129 : vector<8x128xf32>
    %cst_58 = arith.constant 0.00999999977 : f32
    %131 = vector.broadcast %cst_58 : f32 to vector<8x128xf32>
    %132 = arith.mulf %131, %128 : vector<8x128xf32>
    %133 = arith.select %130, %128, %132 : vector<8x128xi1>, vector<8x128xf32>
    %cst_59 = arith.constant dense<0.000000e+00> : vector<8x128xf32>
    %134 = tpu.matmul %133, %2, %cst_59 {dimension_numbers = #tpu.dot_dimension_numbers<[1], [0], [0], [1], [0, 0, 1, 1], [], []>} : vector<8x128xf32>, vector<128x128xf32>, vector<8x128xf32> -> vector<8x128xf32>
    %135 = vector.broadcast %7 : vector<1x128xf32> to vector<8x128xf32>
    %136 = arith.addf %134, %135 : vector<8x128xf32>
    %cst_60 = arith.constant 2.000000e+01 : f32
    %137 = vector.broadcast %cst_60 : f32 to vector<8x128xf32>
    %138 = arith.cmpf ogt, %136, %137 : vector<8x128xf32>
    %cst_61 = arith.constant 2.000000e+01 : f32
    %139 = vector.broadcast %cst_61 : f32 to vector<8x128xf32>
    %140 = arith.minimumf %136, %139 : vector<8x128xf32>
    %141 = math.exp %140 : vector<8x128xf32>
    %142 = math.log1p %141 : vector<8x128xf32>
    %143 = arith.select %138, %136, %142 : vector<8x128xi1>, vector<8x128xf32>
    %144 = tpu.iota {dimensions = array<i32: 1>} : vector<8x128xi32>
    %c4_i32 = arith.constant 4 : i32
    %145 = vector.broadcast %c4_i32 : i32 to vector<8x128xi32>
    %146 = arith.cmpi slt, %144, %145 : vector<8x128xi32>
    %c8_i32 = arith.constant 8 : i32
    %147 = vector.broadcast %c8_i32 : i32 to vector<8x128xi32>
    %148 = arith.cmpi slt, %144, %147 : vector<8x128xi32>
    %cst_62 = arith.constant 0.000000e+00 : f32
    %149 = vector.broadcast %cst_62 : f32 to vector<8x128xf32>
    %150 = arith.select %148, %143, %149 : vector<8x128xi1>, vector<8x128xf32>
    %151 = arith.select %146, %136, %150 : vector<8x128xi1>, vector<8x128xf32>
    %c0_63 = arith.constant 0 : index
    %c0_64 = arith.constant 0 : index
    %152 = vector.load %arg7[%c0_63, %c0_64] : memref<8x128xf32, #tpu.memory_space<vmem>>, vector<8x128xf32>
    tpu.vector_store %arg7[%c0_63, %c0_64], %151 {strides = array<i32>} : memref<8x128xf32, #tpu.memory_space<vmem>>, vector<8x128xf32>,
    return
  }
  func.func @transform_0(%arg0: i32) -> (i32, i32, i32) {
    %c0_i32 = arith.constant 0 : i32
    %c0_i32_0 = arith.constant 0 : i32
    %c0_i32_1 = arith.constant 0 : i32
    return %c0_i32, %arg0, %c0_i32_0 : i32, i32, i32
  }
  func.func @transform_1(%arg0: i32) -> (i32, i32) {
    %c0_i32 = arith.constant 0 : i32
    %c0_i32_0 = arith.constant 0 : i32
    %c0_i32_1 = arith.constant 0 : i32
    return %c0_i32, %c0_i32_0 : i32, i32
  }
  func.func @transform_2(%arg0: i32) -> (i32, i32) {
    %c0_i32 = arith.constant 0 : i32
    %c0_i32_0 = arith.constant 0 : i32
    %c0_i32_1 = arith.constant 0 : i32
    return %c0_i32, %c0_i32_0 : i32, i32
  }
  func.func @transform_3(%arg0: i32) -> (i32, i32) {
    %c0_i32 = arith.constant 0 : i32
    %c0_i32_0 = arith.constant 0 : i32
    %c0_i32_1 = arith.constant 0 : i32
    return %c0_i32, %c0_i32_0 : i32, i32
  }
  func.func @transform_4(%arg0: i32) -> (i32, i32) {
    %c0_i32 = arith.constant 0 : i32
    %c0_i32_0 = arith.constant 0 : i32
    %c0_i32_1 = arith.constant 0 : i32
    return %c0_i32, %c0_i32_0 : i32, i32
  }
  func.func @transform_5(%arg0: i32) -> (i32, i32) {
    %c0_i32 = arith.constant 0 : i32
    %c0_i32_0 = arith.constant 0 : i32
    %c0_i32_1 = arith.constant 0 : i32
    return %c0_i32, %c0_i32_0 : i32, i32
  }
  func.func @transform_6(%arg0: i32) -> (i32, i32) {
    %c0_i32 = arith.constant 0 : i32
    %c0_i32_0 = arith.constant 0 : i32
    return %arg0, %c0_i32 : i32, i32
  }
}

</mosaic_0001>

<llo_original>
// kernel: tpu_custom_call.1
$region0: #{tpu_custom_call.1}
  #allocation0 [shape = 'u32[]', space=smem, size = 0x4, offset = 0x4, fixed_abs, tag = 'smem constant byte address 0x4 - core index']
  #allocation1 [shape = 'u32[144,128]{1,0:T(1,128)}', space=vmem, size = 0x12000, scoped, tag = 'internal scratch']
  %s0 = inlined_call_operand.vmem [shape: f32[4,8,32], index: 0, kind: input, shape index: {}]
  %s1 = inlined_call_operand.vmem [shape: f32[32,256], index: 1, kind: input, shape index: {}]
  %s2 = inlined_call_operand.hbm [shape: f32[128,256], index: 2, kind: input, shape index: {}]
  %s3 = inlined_call_operand.vmem [shape: f32[8,256], index: 3, kind: input, shape index: {}]
  %s4 = inlined_call_operand.vmem [shape: f32[128,4], index: 4, kind: input, shape index: {}]
  %s5 = inlined_call_operand.vmem [shape: f32[4,128], index: 5, kind: input, shape index: {}]
  %s6 = inlined_call_operand.hbm [shape: f32[8,128], index: 6, kind: output, shape index: {}]
  %s7 = sld [smem:[#allocation0]]
  $region38: #{tpu_custom_call.1} parent=0
    _
  %s9 = ssub.s32 1, %s7
  %s10 = scalar_select 0, %s9, %s7
  $region1: #{tpu_custom_call.1} parent=0
    #allocation2 [shape = 'u8[131072]{0}', space=vmem, size = 0x20000, scoped, tag = 'input window, operand 2, single buffered']
    #allocation3 [shape = 's32[1]{0}', space=sflag, size = 0x4, scoped, tag = 'scoped memory for tpu_custom_call.1']
    #allocation4 [shape = 's32[1]{0}', space=sflag, size = 0x4, scoped, tag = 'scoped memory for tpu_custom_call.1']
    #allocation5 [shape = 'u8[4096]{0}', space=vmem, size = 0x1000, scoped, tag = 'output window, operand 0, single buffered']
    %11 = vsyncpa [#allocation3], 0
    %12 = vsyncpa [#allocation4], 0
    // Predicated region
    $region2: #{tpu_custom_call.1} parent=1 // pred_check
      _
    $region3: #{tpu_custom_call.1} parent=1 // pred_check_branch
      %14 = sbr.rel (0) target = $region5
    $region4: #{tpu_custom_call.1} parent=1 // pred_region
      _
    $region5: #{tpu_custom_call.1} parent=1 // pred_fallthru
      _
    // Predicated region
    $region6: #{tpu_custom_call.1} parent=1 // pred_check
      _
    $region7: #{tpu_custom_call.1} parent=1 // pred_check_branch
      %16 = sbr.rel (0) target = $region9
    $region8: #{tpu_custom_call.1} parent=1 // pred_region
      _
    $region9: #{tpu_custom_call.1} parent=1 // pred_fallthru
      _
    // Predicated region
    $region10: #{tpu_custom_call.1} parent=1 // pred_check
      _
    $region11: #{tpu_custom_call.1} parent=1 // pred_check_branch
      %18 = sbr.rel (0) target = $region13
    $region12: #{tpu_custom_call.1} parent=1 // pred_region
      %s20 = ssub.s32 4096, 4096
      %21 = vsyncadd [#allocation3], %s20
      %s22 = sshll.u32 [#allocation2], 4
      %s23 = int_to_ptr.vmem [resolvable:$true] %s22
      %28 = dma.hbm_to_vmem [thread:$0]  %s2, 4096, %s23, [#allocation3], 256, 256, 16
    $region13: #{tpu_custom_call.1} parent=1 // pred_fallthru
      _
    // Predicated region
    $region14: #{tpu_custom_call.1} parent=1 // pred_check
      _
    $region15: #{tpu_custom_call.1} parent=1 // pred_check_branch
      %30 = sbr.rel (0) target = $region17
    $region16: #{tpu_custom_call.1} parent=1 // pred_region
      _
    $region17: #{tpu_custom_call.1} parent=1 // pred_fallthru
      _
    // Predicated region
    $region18: #{tpu_custom_call.1} parent=1 // pred_check
      _
    $region19: #{tpu_custom_call.1} parent=1 // pred_check_branch
      %32 = sbr.rel (0) target = $region21
    $region20: #{tpu_custom_call.1} parent=1 // pred_region
      _
    $region21: #{tpu_custom_call.1} parent=1 // pred_fallthru
      _
    // Predicated region
    $region22: #{tpu_custom_call.1} parent=1 // pred_check
      _
    $region23: #{tpu_custom_call.1} parent=1 // pred_check_branch
      %34 = sbr.rel (0) target = $region25
    $region24: #{tpu_custom_call.1} parent=1 // pred_region
      _
    $region25: #{tpu_custom_call.1} parent=1 // pred_fallthru
      _
    // Predicated region
    $region26: #{tpu_custom_call.1} parent=1 // pred_check
      _
    $region27: #{tpu_custom_call.1} parent=1 // pred_check_branch
      %36 = sbr.rel (0) target = $region29
    $region28: #{tpu_custom_call.1} parent=1 // pred_region
      %37 = dma.done [#allocation3], 4096
    $region29: #{tpu_custom_call.1} parent=1 // pred_fallthru
      _
    %v38 = vld [vmem:[%s1] sm:$0xff]
    %v39 = vld [vmem:[%s1 + $0x8] sm:$0xff]
    %v40 = vld [vmem:[%s1 + $0x10] sm:$0xff]
    %v41 = vld [vmem:[%s1 + $0x18] sm:$0xff]
    %v42 = vld [vmem:[%s1 + $0x20] sm:$0xff]
    %v43 = vld [vmem:[%s1 + $0x28] sm:$0xff]
    %v44 = vld [vmem:[%s1 + $0x30] sm:$0xff]
    %v45 = vld [vmem:[%s1 + $0x38] sm:$0xff]
    %v46 = vld [vmem:[#allocation2] sm:$0xff]
    %v47 = vld [vmem:[#allocation2 + $0x10] sm:$0xff]
    %v48 = vld [vmem:[#allocation2 + $0x20] sm:$0xff]
    %v49 = vld [vmem:[#allocation2 + $0x30] sm:$0xff]
    %v50 = vld [vmem:[#allocation2 + $0x40] sm:$0xff]
    %v51 = vld [vmem:[#allocation2 + $0x50] sm:$0xff]
    %v52 = vld [vmem:[#allocation2 + $0x60] sm:$0xff]
    %v53 = vld [vmem:[#allocation2 + $0x70] sm:$0xff]
    %v54 = vld [vmem:[#allocation2 + $0x80] sm:$0xff]
    %v55 = vld [vmem:[#allocation2 + $0x90] sm:$0xff]
    %v56 = vld [vmem:[#allocation2 + $0xa0] sm:$0xff]
    %v57 = vld [vmem:[#allocation2 + $0xb0] sm:$0xff]
    %v58 = vld [vmem:[#allocation2 + $0xc0] sm:$0xff]
    %v59 = vld [vmem:[#allocation2 + $0xd0] sm:$0xff]
    %v60 = vld [vmem:[#allocation2 + $0xe0] sm:$0xff]
    %v61 = vld [vmem:[#allocation2 + $0xf0] sm:$0xff]
    %v62 = vld [vmem:[#allocation2 + $0x8] sm:$0xff]
    %v63 = vld [vmem:[#allocation2 + $0x18] sm:$0xff]
    %v64 = vld [vmem:[#allocation2 + $0x28] sm:$0xff]
    %v65 = vld [vmem:[#allocation2 + $0x38] sm:$0xff]
    %v66 = vld [vmem:[#allocation2 + $0x48] sm:$0xff]
    %v67 = vld [vmem:[#allocation2 + $0x58] sm:$0xff]
    %v68 = vld [vmem:[#allocation2 + $0x68] sm:$0xff]
    %v69 = vld [vmem:[#allocation2 + $0x78] sm:$0xff]
    %v70 = vld [vmem:[#allocation2 + $0x88] sm:$0xff]
    %v71 = vld [vmem:[#allocation2 + $0x98] sm:$0xff]
    %v72 = vld [vmem:[#allocation2 + $0xa8] sm:$0xff]
    %v73 = vld [vmem:[#allocation2 + $0xb8] sm:$0xff]
    %v74 = vld [vmem:[#allocation2 + $0xc8] sm:$0xff]
    %v75 = vld [vmem:[#allocation2 + $0xd8] sm:$0xff]
    %v76 = vld [vmem:[#allocation2 + $0xe8] sm:$0xff]
    %v77 = vld [vmem:[#allocation2 + $0xf8] sm:$0xff]
    %v78 = vld [vmem:[%s3] ss:$8 sm:$0x3]
    %v79 = vld [vmem:[%s3 + $0x1] ss:$0 sm:$0xff]
    %v80 = vld [vmem:[%s3 + $0x2] ss:$0 sm:$0xff]
    %v81 = vld [vmem:[%s3 + $0x3] ss:$0 sm:$0xff]
    %v82 = vld [vmem:[%s3 + $0x4] ss:$0 sm:$0xff]
    %v83 = vld [vmem:[%s4] sm:$0xff]
    %v84 = vld [vmem:[%s4 + $0x8] sm:$0xff]
    %v85 = vld [vmem:[%s4 + $0x10] sm:$0xff]
    %v86 = vld [vmem:[%s4 + $0x18] sm:$0xff]
    %v87 = vld [vmem:[%s4 + $0x20] sm:$0xff]
    %v88 = vld [vmem:[%s4 + $0x28] sm:$0xff]
    %v89 = vld [vmem:[%s4 + $0x30] sm:$0xff]
    %v90 = vld [vmem:[%s4 + $0x38] sm:$0xff]
    %v91 = vld [vmem:[%s4 + $0x40] sm:$0xff]
    %v92 = vld [vmem:[%s4 + $0x48] sm:$0xff]
    %v93 = vld [vmem:[%s4 + $0x50] sm:$0xff]
    %v94 = vld [vmem:[%s4 + $0x58] sm:$0xff]
    %v95 = vld [vmem:[%s4 + $0x60] sm:$0xff]
    %v96 = vld [vmem:[%s4 + $0x68] sm:$0xff]
    %v97 = vld [vmem:[%s4 + $0x70] sm:$0xff]
    %v98 = vld [vmem:[%s4 + $0x78] sm:$0xff]
    %v99 = vld [vmem:[%s5] sm:$0xf]
    %v100 = vld [vmem:[%s0] sm:$0xff]
    %v102 = vlaneseq
    %v103 = vshrl.u32 %v102, 7
    %v104 = vsub.s32 0, %v103
    %v105 = vrot.slane %v78, %v104
    %v106 = vlaneseq
    %v107 = vshrl.u32 %v106, 7
    %v108 = vsub.s32 1, %v107
    %v109 = vrot.slane %v78, %v108
    %vm112 = vcmask 261120
    %v114 = vsel %vm112, %v100, 0
    %116 = vmatprep.subr.mxu0 %v39
    %117 = vmatpush1.msra.mxu0 %v38
    %118 = vmatprep.subr.mxu0 %v41
    %119 = vmatpush1.msra.mxu0 %v40
    %120 = vmatprep.subr.mxu0 %v43
    %121 = vmatpush1.msra.mxu0 %v42
    %122 = vmatprep.subr.mxu0 %v45
    %123 = vmatpush1.msra.mxu0 %v44
    %124 = vmatprep.subr.mxu0 0.0
    %125 = vmatpush1.msra.mxu0 0.0
    %126 = vmatprep.subr.mxu0 0.0
    %127 = vmatpush1.msra.mxu0 0.0
    %128 = vmatprep.subr.mxu0 0.0
    %129 = vmatpush1.msra.mxu0 0.0
    %130 = vmatprep.subr.mxu0 0.0
    %131 = vmatpush1.msra.mxu0 0.0
    %132 = vmatprep.subr.mxu0 0.0
    %133 = vmatpush1.msra.mxu0 0.0
    %134 = vmatprep.subr.mxu0 0.0
    %135 = vmatpush1.msra.mxu0 0.0
    %136 = vmatprep.subr.mxu0 0.0
    %137 = vmatpush1.msra.mxu0 0.0
    %138 = vmatprep.subr.mxu0 0.0
    %139 = vmatpush1.msra.mxu0 0.0
    %140 = vmatprep.subr.mxu0 0.0
    %141 = vmatpush1.msra.mxu0 0.0
    %142 = vmatprep.subr.mxu0 0.0
    %143 = vmatpush1.msra.mxu0 0.0
    %144 = vmatprep.subr.mxu0 0.0
    %145 = vmatpush1.msra.mxu0 0.0
    %146 = vmatprep.subr.mxu0 0.0
    %147 = vmatpush1.msra.mxu0 0.0
    %148 = vmatprep.subr.mxu0 0.0
    %149 = vmatpush1.msra.mxu0 0.0
    %150 = vmatprep.subr.mxu0 0.0
    %151 = vmatpush1.msra.mxu0 0.0
    %152 = vmatprep.subr.mxu0 0.0
    %153 = vmatpush1.msra.mxu0 0.0
    %154 = vmatprep.subr.mxu0 0.0
    %155 = vmatpush1.msra.mxu0 0.0
    %156 = vmatprep.subr.mxu0 0.0
    %157 = vmatpush1.msra.mxu0 0.0
    %158 = vmatprep.subr.mxu0 0.0
    %159 = vmatpush1.msra.mxu0 0.0
    %160 = vmatprep.subr.mxu0 0.0
    %161 = vmatpush1.msra.mxu0 0.0
    %162 = vmatprep.subr.mxu0 0.0
    %163 = vmatpush1.msra.mxu0 0.0
    %164 = vmatprep.subr.mxu0 0.0
    %165 = vmatpush1.msra.mxu0 0.0
    %166 = vmatprep.subr.mxu0 0.0
    %167 = vmatpush1.msra.mxu0 0.0
    %168 = vmatprep.subr.mxu0 0.0
    %169 = vmatpush1.msra.mxu0 0.0
    %170 = vmatprep.subr.mxu0 0.0
    %171 = vmatpush1.msra.mxu0 0.0
    %172 = vmatprep.subr.mxu0 0.0
    %173 = vmatpush1.msra.mxu0 0.0
    %174 = vmatprep.subr.mxu0 0.0
    %175 = vmatpush1.msra.mxu0 0.0
    %176 = vmatprep.subr.mxu0 0.0
    %177 = vmatpush1.msra.mxu0 0.0
    %178 = vmatprep.subr.mxu0 0.0
    %179 = vmatpush1.msra.mxu0 0.0
    %180 = vmatprep.mubr.f32.mxu0 0.0
    %181 = vmatmul.mubr.f32.gmra.mrb[0].mxu0 %v114
    %v182 = vpop.f32.mrb[0].mxu0
    %v183 = vadd.f32 %v105, %v182
    %v184 = vpop.f32.mrb[0].mxu0
    %v185 = vadd.f32 %v109, %v184
    %186 = vdwg.mxu0
    %v187 = vmul.f32 %v183, %v183
    %188 = vmatprep.subr.mxu0 0.0
    %189 = vmatpush1.msra.mxu0 %v83
    %190 = vmatprep.subr.mxu0 0.0
    %191 = vmatpush1.msra.mxu0 %v84
    %192 = vmatprep.subr.mxu0 0.0
    %193 = vmatpush1.msra.mxu0 %v85
    %194 = vmatprep.subr.mxu0 0.0
    %195 = vmatpush1.msra.mxu0 %v86
    %196 = vmatprep.subr.mxu0 0.0
    %197 = vmatpush1.msra.mxu0 %v87
    %198 = vmatprep.subr.mxu0 0.0
    %199 = vmatpush1.msra.mxu0 %v88
    %200 = vmatprep.subr.mxu0 0.0
    %201 = vmatpush1.msra.mxu0 %v89
    %202 = vmatprep.subr.mxu0 0.0
    %203 = vmatpush1.msra.mxu0 %v90
    %204 = vmatprep.subr.mxu0 0.0
    %205 = vmatpush1.msra.mxu0 %v91
    %206 = vmatprep.subr.mxu0 0.0
    %207 = vmatpush1.msra.mxu0 %v92
    %208 = vmatprep.subr.mxu0 0.0
    %209 = vmatpush1.msra.mxu0 %v93
    %210 = vmatprep.subr.mxu0 0.0
    %211 = vmatpush1.msra.mxu0 %v94
    %212 = vmatprep.subr.mxu0 0.0
    %213 = vmatpush1.msra.mxu0 %v95
    %214 = vmatprep.subr.mxu0 0.0
    %215 = vmatpush1.msra.mxu0 %v96
    %216 = vmatprep.subr.mxu0 0.0
    %217 = vmatpush1.msra.mxu0 %v97
    %218 = vmatprep.subr.mxu0 0.0
    %219 = vmatpush1.msra.mxu0 %v98
    %220 = vmatprep.subr.mxu0 0.0
    %221 = vmatpush1.msra.mxu0 0.0
    %222 = vmatprep.subr.mxu0 0.0
    %223 = vmatpush1.msra.mxu0 0.0
    %224 = vmatprep.subr.mxu0 0.0
    %225 = vmatpush1.msra.mxu0 0.0
    %226 = vmatprep.subr.mxu0 0.0
    %227 = vmatpush1.msra.mxu0 0.0
    %228 = vmatprep.subr.mxu0 0.0
    %229 = vmatpush1.msra.mxu0 0.0
    %230 = vmatprep.subr.mxu0 0.0
    %231 = vmatpush1.msra.mxu0 0.0
    %232 = vmatprep.subr.mxu0 0.0
    %233 = vmatpush1.msra.mxu0 0.0
    %234 = vmatprep.subr.mxu0 0.0
    %235 = vmatpush1.msra.mxu0 0.0
    %236 = vmatprep.subr.mxu0 0.0
    %237 = vmatpush1.msra.mxu0 0.0
    %238 = vmatprep.subr.mxu0 0.0
    %239 = vmatpush1.msra.mxu0 0.0
    %240 = vmatprep.subr.mxu0 0.0
    %241 = vmatpush1.msra.mxu0 0.0
    %242 = vmatprep.subr.mxu0 0.0
    %243 = vmatpush1.msra.mxu0 0.0
    %244 = vmatprep.subr.mxu0 0.0
    %245 = vmatpush1.msra.mxu0 0.0
    %246 = vmatprep.subr.mxu0 0.0
    %247 = vmatpush1.msra.mxu0 0.0
    %248 = vmatprep.subr.mxu0 0.0
    %249 = vmatpush1.msra.mxu0 0.0
    %250 = vmatprep.subr.mxu0 0.0
    %251 = vmatpush1.msra.mxu0 0.0
    %252 = vmatprep.mubr.f32.mxu0 0.0
    %253 = vmatmul.mubr.f32.gmra.mrb[0].mxu0 %v187
    %v254 = vpop.f32.mrb[0].mxu0
    %v255 = vadd.f32 0.0, %v254
    %v256 = vpop.f32.mrb[0].mxu0
    %257 = vdwg.mxu0
    %v258 = vmul.f32 %v183, %v79
    %259 = vmatprep.subr.mxu0 0.0
    %260 = vmatpush1.msra.mxu0 %v83
    %261 = vmatprep.subr.mxu0 0.0
    %262 = vmatpush1.msra.mxu0 %v84
    %263 = vmatprep.subr.mxu0 0.0
    %264 = vmatpush1.msra.mxu0 %v85
    %265 = vmatprep.subr.mxu0 0.0
    %266 = vmatpush1.msra.mxu0 %v86
    %267 = vmatprep.subr.mxu0 0.0
    %268 = vmatpush1.msra.mxu0 %v87
    %269 = vmatprep.subr.mxu0 0.0
    %270 = vmatpush1.msra.mxu0 %v88
    %271 = vmatprep.subr.mxu0 0.0
    %272 = vmatpush1.msra.mxu0 %v89
    %273 = vmatprep.subr.mxu0 0.0
    %274 = vmatpush1.msra.mxu0 %v90
    %275 = vmatprep.subr.mxu0 0.0
    %276 = vmatpush1.msra.mxu0 %v91
    %277 = vmatprep.subr.mxu0 0.0
    %278 = vmatpush1.msra.mxu0 %v92
    %279 = vmatprep.subr.mxu0 0.0
    %280 = vmatpush1.msra.mxu0 %v93
    %281 = vmatprep.subr.mxu0 0.0
    %282 = vmatpush1.msra.mxu0 %v94
    %283 = vmatprep.subr.mxu0 0.0
    %284 = vmatpush1.msra.mxu0 %v95
    %285 = vmatprep.subr.mxu0 0.0
    %286 = vmatpush1.msra.mxu0 %v96
    %287 = vmatprep.subr.mxu0 0.0
    %288 = vmatpush1.msra.mxu0 %v97
    %289 = vmatprep.subr.mxu0 0.0
    %290 = vmatpush1.msra.mxu0 %v98
    %291 = vmatprep.subr.mxu0 0.0
    %292 = vmatpush1.msra.mxu0 0.0
    %293 = vmatprep.subr.mxu0 0.0
    %294 = vmatpush1.msra.mxu0 0.0
    %295 = vmatprep.subr.mxu0 0.0
    %296 = vmatpush1.msra.mxu0 0.0
    %297 = vmatprep.subr.mxu0 0.0
    %298 = vmatpush1.msra.mxu0 0.0
    %299 = vmatprep.subr.mxu0 0.0
    %300 = vmatpush1.msra.mxu0 0.0
    %301 = vmatprep.subr.mxu0 0.0
    %302 = vmatpush1.msra.mxu0 0.0
    %303 = vmatprep.subr.mxu0 0.0
    %304 = vmatpush1.msra.mxu0 0.0
    %305 = vmatprep.subr.mxu0 0.0
    %306 = vmatpush1.msra.mxu0 0.0
    %307 = vmatprep.subr.mxu0 0.0
    %308 = vmatpush1.msra.mxu0 0.0
    %309 = vmatprep.subr.mxu0 0.0
    %310 = vmatpush1.msra.mxu0 0.0
    %311 = vmatprep.subr.mxu0 0.0
    %312 = vmatpush1.msra.mxu0 0.0
    %313 = vmatprep.subr.mxu0 0.0
    %314 = vmatpush1.msra.mxu0 0.0
    %315 = vmatprep.subr.mxu0 0.0
    %316 = vmatpush1.msra.mxu0 0.0
    %317 = vmatprep.subr.mxu0 0.0
    %318 = vmatpush1.msra.mxu0 0.0
    %319 = vmatprep.subr.mxu0 0.0
    %320 = vmatpush1.msra.mxu0 0.0
    %321 = vmatprep.subr.mxu0 0.0
    %322 = vmatpush1.msra.mxu0 0.0
    %323 = vmatprep.mubr.f32.mxu0 0.0
    %324 = vmatmul.mubr.f32.gmra.mrb[0].mxu0 %v258
    %v325 = vpop.f32.mrb[0].mxu0
    %v326 = vadd.f32 0.0, %v325
    %v327 = vpop.f32.mrb[0].mxu0
    %328 = vdwg.mxu0
    %v329 = vrsqrt.pop %v255
    %v330 = vmul.f32 %v255, %v329
    %vm331 = vcmp.eq.f32.partialorder %v255, inf
    %v332 = vsel %vm331, %v255, %v330
    %vm333 = vcmp.eq.f32.partialorder %v255, 0.0
    %v334 = vand.u32 %v255, 2147483648
    %v335 = vsel %vm333, %v334, %v332
    %v336 = vmul.f32 %v80, %v335
    %v337 = vmax.f32 %v336, 1.1920929e-07
    %v338 = vrcp.pop %v337
    %v339 = vmul.f32 %v326, %v338
    %vm340 = vcmp.ge.f32.partialorder %v339, 0.0
    %v341 = vmul.f32 %v339, 0.01
    %v342 = vsel %vm340, %v339, %v341
    %v343 = vmul.f32 %v342, 1.442695
    %v344 = vpow.pop %v343
    %vm345 = vcmask 31744
    %v347 = vsel %vm345, %v344, 0
    %vm349 = vcmask 1043456
    %v351 = vsel %vm349, %v99, 0
    %353 = vmatprep.subr.mxu0 0.0
    %354 = vmatpush1.msra.mxu0 %v351
    %355 = vmatprep.subr.mxu0 0.0
    %356 = vmatpush1.msra.mxu0 0.0
    %357 = vmatprep.subr.mxu0 0.0
    %358 = vmatpush1.msra.mxu0 0.0
    %359 = vmatprep.subr.mxu0 0.0
    %360 = vmatpush1.msra.mxu0 0.0
    %361 = vmatprep.subr.mxu0 0.0
    %362 = vmatpush1.msra.mxu0 0.0
    %363 = vmatprep.subr.mxu0 0.0
    %364 = vmatpush1.msra.mxu0 0.0
    %365 = vmatprep.subr.mxu0 0.0
    %366 = vmatpush1.msra.mxu0 0.0
    %367 = vmatprep.subr.mxu0 0.0
    %368 = vmatpush1.msra.mxu0 0.0
    %369 = vmatprep.subr.mxu0 0.0
    %370 = vmatpush1.msra.mxu0 0.0
    %371 = vmatprep.subr.mxu0 0.0
    %372 = vmatpush1.msra.mxu0 0.0
    %373 = vmatprep.subr.mxu0 0.0
    %374 = vmatpush1.msra.mxu0 0.0
    %375 = vmatprep.subr.mxu0 0.0
    %376 = vmatpush1.msra.mxu0 0.0
    %377 = vmatprep.subr.mxu0 0.0
    %378 = vmatpush1.msra.mxu0 0.0
    %379 = vmatprep.subr.mxu0 0.0
    %380 = vmatpush1.msra.mxu0 0.0
    %381 = vmatprep.subr.mxu0 0.0
    %382 = vmatpush1.msra.mxu0 0.0
    %383 = vmatprep.subr.mxu0 0.0
    %384 = vmatpush1.msra.mxu0 0.0
    %385 = vmatprep.subr.mxu0 0.0
    %386 = vmatpush1.msra.mxu0 0.0
    %387 = vmatprep.subr.mxu0 0.0
    %388 = vmatpush1.msra.mxu0 0.0
    %389 = vmatprep.subr.mxu0 0.0
    %390 = vmatpush1.msra.mxu0 0.0
    %391 = vmatprep.subr.mxu0 0.0
    %392 = vmatpush1.msra.mxu0 0.0
    %393 = vmatprep.subr.mxu0 0.0
    %394 = vmatpush1.msra.mxu0 0.0
    %395 = vmatprep.subr.mxu0 0.0
    %396 = vmatpush1.msra.mxu0 0.0
    %397 = vmatprep.subr.mxu0 0.0
    %398 = vmatpush1.msra.mxu0 0.0
    %399 = vmatprep.subr.mxu0 0.0
    %400 = vmatpush1.msra.mxu0 0.0
    %401 = vmatprep.subr.mxu0 0.0
    %402 = vmatpush1.msra.mxu0 0.0
    %403 = vmatprep.subr.mxu0 0.0
    %404 = vmatpush1.msra.mxu0 0.0
    %405 = vmatprep.subr.mxu0 0.0
    %406 = vmatpush1.msra.mxu0 0.0
    %407 = vmatprep.subr.mxu0 0.0
    %408 = vmatpush1.msra.mxu0 0.0
    %409 = vmatprep.subr.mxu0 0.0
    %410 = vmatpush1.msra.mxu0 0.0
    %411 = vmatprep.subr.mxu0 0.0
    %412 = vmatpush1.msra.mxu0 0.0
    %413 = vmatprep.subr.mxu0 0.0
    %414 = vmatpush1.msra.mxu0 0.0
    %415 = vmatprep.subr.mxu0 0.0
    %416 = vmatpush1.msra.mxu0 0.0
    %417 = vmatprep.mubr.f32.mxu0 0.0
    %418 = vmatmul.mubr.f32.gmra.mrb[0].mxu0 %v347
    %v419 = vpop.f32.mrb[0].mxu0
    %v420 = vadd.f32 0.0, %v419
    %v421 = vpop.f32.mrb[0].mxu0
    %422 = vdwg.mxu0
    %v423 = vmul.f32 %v420, %v185
    %v424 = vadd.f32 %v423, 0.0
    %v425 = vadd.f32 %v344, 0.0
    %s426 = scalar_lea.vmem %s0, 8
    %v427 = vld [vmem:[%s426] sm:$0xff]
    %v429 = vsel %vm112, %v427, 0
    %431 = vmatprep.subr.mxu0 %v39
    %432 = vmatpush1.msra.mxu0 %v38
    %433 = vmatprep.subr.mxu0 %v41
    %434 = vmatpush1.msra.mxu0 %v40
    %435 = vmatprep.subr.mxu0 %v43
    %436 = vmatpush1.msra.mxu0 %v42
    %437 = vmatprep.subr.mxu0 %v45
    %438 = vmatpush1.msra.mxu0 %v44
    %439 = vmatprep.subr.mxu0 0.0
    %440 = vmatpush1.msra.mxu0 0.0
    %441 = vmatprep.subr.mxu0 0.0
    %442 = vmatpush1.msra.mxu0 0.0
    %443 = vmatprep.subr.mxu0 0.0
    %444 = vmatpush1.msra.mxu0 0.0
    %445 = vmatprep.subr.mxu0 0.0
    %446 = vmatpush1.msra.mxu0 0.0
    %447 = vmatprep.subr.mxu0 0.0
    %448 = vmatpush1.msra.mxu0 0.0
    %449 = vmatprep.subr.mxu0 0.0
    %450 = vmatpush1.msra.mxu0 0.0
    %451 = vmatprep.subr.mxu0 0.0
    %452 = vmatpush1.msra.mxu0 0.0
    %453 = vmatprep.subr.mxu0 0.0
    %454 = vmatpush1.msra.mxu0 0.0
    %455 = vmatprep.subr.mxu0 0.0
    %456 = vmatpush1.msra.mxu0 0.0
    %457 = vmatprep.subr.mxu0 0.0
    %458 = vmatpush1.msra.mxu0 0.0
    %459 = vmatprep.subr.mxu0 0.0
    %460 = vmatpush1.msra.mxu0 0.0
    %461 = vmatprep.subr.mxu0 0.0
    %462 = vmatpush1.msra.mxu0 0.0
    %463 = vmatprep.subr.mxu0 0.0
    %464 = vmatpush1.msra.mxu0 0.0
    %465 = vmatprep.subr.mxu0 0.0
    %466 = vmatpush1.msra.mxu0 0.0
    %467 = vmatprep.subr.mxu0 0.0
    %468 = vmatpush1.msra.mxu0 0.0
    %469 = vmatprep.subr.mxu0 0.0
    %470 = vmatpush1.msra.mxu0 0.0
    %471 = vmatprep.subr.mxu0 0.0
    %472 = vmatpush1.msra.mxu0 0.0
    %473 = vmatprep.subr.mxu0 0.0
    %474 = vmatpush1.msra.mxu0 0.0
    %475 = vmatprep.subr.mxu0 0.0
    %476 = vmatpush1.msra.mxu0 0.0
    %477 = vmatprep.subr.mxu0 0.0
    %478 = vmatpush1.msra.mxu0 0.0
    %479 = vmatprep.subr.mxu0 0.0
    %480 = vmatpush1.msra.mxu0 0.0
    %481 = vmatprep.subr.mxu0 0.0
    %482 = vmatpush1.msra.mxu0 0.0
    %483 = vmatprep.subr.mxu0 0.0
    %484 = vmatpush1.msra.mxu0 0.0
    %485 = vmatprep.subr.mxu0 0.0
    %486 = vmatpush1.msra.mxu0 0.0
    %487 = vmatprep.subr.mxu0 0.0
    %488 = vmatpush1.msra.mxu0 0.0
    %489 = vmatprep.subr.mxu0 0.0
    %490 = vmatpush1.msra.mxu0 0.0
    %491 = vmatprep.subr.mxu0 0.0
    %492 = vmatpush1.msra.mxu0 0.0
    %493 = vmatprep.subr.mxu0 0.0
    %494 = vmatpush1.msra.mxu0 0.0
    %495 = vmatprep.mubr.f32.mxu0 0.0
    %496 = vmatmul.mubr.f32.gmra.mrb[0].mxu0 %v429
    %v497 = vpop.f32.mrb[0].mxu0
    %v498 = vadd.f32 %v105, %v497
    %v499 = vpop.f32.mrb[0].mxu0
    %v500 = vadd.f32 %v109, %v499
    %501 = vdwg.mxu0
    %v502 = vmul.f32 %v498, %v498
    %503 = vmatprep.subr.mxu0 0.0
    %504 = vmatpush1.msra.mxu0 %v83
    %505 = vmatprep.subr.mxu0 0.0
    %506 = vmatpush1.msra.mxu0 %v84
    %507 = vmatprep.subr.mxu0 0.0
    %508 = vmatpush1.msra.mxu0 %v85
    %509 = vmatprep.subr.mxu0 0.0
    %510 = vmatpush1.msra.mxu0 %v86
    %511 = vmatprep.subr.mxu0 0.0
    %512 = vmatpush1.msra.mxu0 %v87
    %513 = vmatprep.subr.mxu0 0.0
    %514 = vmatpush1.msra.mxu0 %v88
    %515 = vmatprep.subr.mxu0 0.0
    %516 = vmatpush1.msra.mxu0 %v89
    %517 = vmatprep.subr.mxu0 0.0
    %518 = vmatpush1.msra.mxu0 %v90
    %519 = vmatprep.subr.mxu0 0.0
    %520 = vmatpush1.msra.mxu0 %v91
    %521 = vmatprep.subr.mxu0 0.0
    %522 = vmatpush1.msra.mxu0 %v92
    %523 = vmatprep.subr.mxu0 0.0
    %524 = vmatpush1.msra.mxu0 %v93
    %525 = vmatprep.subr.mxu0 0.0
    %526 = vmatpush1.msra.mxu0 %v94
    %527 = vmatprep.subr.mxu0 0.0
    %528 = vmatpush1.msra.mxu0 %v95
    %529 = vmatprep.subr.mxu0 0.0
    %530 = vmatpush1.msra.mxu0 %v96
    %531 = vmatprep.subr.mxu0 0.0
    %532 = vmatpush1.msra.mxu0 %v97
    %533 = vmatprep.subr.mxu0 0.0
    %534 = vmatpush1.msra.mxu0 %v98
    %535 = vmatprep.subr.mxu0 0.0
    %536 = vmatpush1.msra.mxu0 0.0
    %537 = vmatprep.subr.mxu0 0.0
    %538 = vmatpush1.msra.mxu0 0.0
    %539 = vmatprep.subr.mxu0 0.0
    %540 = vmatpush1.msra.mxu0 0.0
    %541 = vmatprep.subr.mxu0 0.0
    %542 = vmatpush1.msra.mxu0 0.0
    %543 = vmatprep.subr.mxu0 0.0
    %544 = vmatpush1.msra.mxu0 0.0
    %545 = vmatprep.subr.mxu0 0.0
    %546 = vmatpush1.msra.mxu0 0.0
    %547 = vmatprep.subr.mxu0 0.0
    %548 = vmatpush1.msra.mxu0 0.0
    %549 = vmatprep.subr.mxu0 0.0
    %550 = vmatpush1.msra.mxu0 0.0
    %551 = vmatprep.subr.mxu0 0.0
    %552 = vmatpush1.msra.mxu0 0.0
    %553 = vmatprep.subr.mxu0 0.0
    %554 = vmatpush1.msra.mxu0 0.0
    %555 = vmatprep.subr.mxu0 0.0
    %556 = vmatpush1.msra.mxu0 0.0
    %557 = vmatprep.subr.mxu0 0.0
    %558 = vmatpush1.msra.mxu0 0.0
    %559 = vmatprep.subr.mxu0 0.0
    %560 = vmatpush1.msra.mxu0 0.0
    %561 = vmatprep.subr.mxu0 0.0
    %562 = vmatpush1.msra.mxu0 0.0
    %563 = vmatprep.subr.mxu0 0.0
    %564 = vmatpush1.msra.mxu0 0.0
    %565 = vmatprep.subr.mxu0 0.0
    %566 = vmatpush1.msra.mxu0 0.0
    %567 = vmatprep.mubr.f32.mxu0 0.0
    %568 = vmatmul.mubr.f32.gmra.mrb[0].mxu0 %v502
    %v569 = vpop.f32.mrb[0].mxu0
    %v570 = vadd.f32 0.0, %v569
    %v571 = vpop.f32.mrb[0].mxu0
    %572 = vdwg.mxu0
    %v573 = vmul.f32 %v498, %v79
    %574 = vmatprep.subr.mxu0 0.0
    %575 = vmatpush1.msra.mxu0 %v83
    %576 = vmatprep.subr.mxu0 0.0
    %577 = vmatpush1.msra.mxu0 %v84
    %578 = vmatprep.subr.mxu0 0.0
    %579 = vmatpush1.msra.mxu0 %v85
    %580 = vmatprep.subr.mxu0 0.0
    %581 = vmatpush1.msra.mxu0 %v86
    %582 = vmatprep.subr.mxu0 0.0
    %583 = vmatpush1.msra.mxu0 %v87
    %584 = vmatprep.subr.mxu0 0.0
    %585 = vmatpush1.msra.mxu0 %v88
    %586 = vmatprep.subr.mxu0 0.0
    %587 = vmatpush1.msra.mxu0 %v89
    %588 = vmatprep.subr.mxu0 0.0
    %589 = vmatpush1.msra.mxu0 %v90
    %590 = vmatprep.subr.mxu0 0.0
    %591 = vmatpush1.msra.mxu0 %v91
    %592 = vmatprep.subr.mxu0 0.0
    %593 = vmatpush1.msra.mxu0 %v92
    %594 = vmatprep.subr.mxu0 0.0
    %595 = vmatpush1.msra.mxu0 %v93
    %596 = vmatprep.subr.mxu0 0.0
    %597 = vmatpush1.msra.mxu0 %v94
    %598 = vmatprep.subr.mxu0 0.0
    %599 = vmatpush1.msra.mxu0 %v95
    %600 = vmatprep.subr.mxu0 0.0
    %601 = vmatpush1.msra.mxu0 %v96
    %602 = vmatprep.subr.mxu0 0.0
    %603 = vmatpush1.msra.mxu0 %v97
    %604 = vmatprep.subr.mxu0 0.0
    %605 = vmatpush1.msra.mxu0 %v98
    %606 = vmatprep.subr.mxu0 0.0
    %607 = vmatpush1.msra.mxu0 0.0
    %608 = vmatprep.subr.mxu0 0.0
    %609 = vmatpush1.msra.mxu0 0.0
    %610 = vmatprep.subr.mxu0 0.0
    %611 = vmatpush1.msra.mxu0 0.0
    %612 = vmatprep.subr.mxu0 0.0
    %613 = vmatpush1.msra.mxu0 0.0
    %614 = vmatprep.subr.mxu0 0.0
    %615 = vmatpush1.msra.mxu0 0.0
    %616 = vmatprep.subr.mxu0 0.0
    %617 = vmatpush1.msra.mxu0 0.0
    %618 = vmatprep.subr.mxu0 0.0
    %619 = vmatpush1.msra.mxu0 0.0
    %620 = vmatprep.subr.mxu0 0.0
    %621 = vmatpush1.msra.mxu0 0.0
    %622 = vmatprep.subr.mxu0 0.0
    %623 = vmatpush1.msra.mxu0 0.0
    %624 = vmatprep.subr.mxu0 0.0
    %625 = vmatpush1.msra.mxu0 0.0
    %626 = vmatprep.subr.mxu0 0.0
    %627 = vmatpush1.msra.mxu0 0.0
    %628 = vmatprep.subr.mxu0 0.0
    %629 = vmatpush1.msra.mxu0 0.0
    %630 = vmatprep.subr.mxu0 0.0
    %631 = vmatpush1.msra.mxu0 0.0
    %632 = vmatprep.subr.mxu0 0.0
    %633 = vmatpush1.msra.mxu0 0.0
    %634 = vmatprep.subr.mxu0 0.0
    %635 = vmatpush1.msra.mxu0 0.0
    %636 = vmatprep.subr.mxu0 0.0
    %637 = vmatpush1.msra.mxu0 0.0
    %638 = vmatprep.mubr.f32.mxu0 0.0
    %639 = vmatmul.mubr.f32.gmra.mrb[0].mxu0 %v573
    %v640 = vpop.f32.mrb[0].mxu0
    %v641 = vadd.f32 0.0, %v640
    %v642 = vpop.f32.mrb[0].mxu0
    %643 = vdwg.mxu0
    %v644 = vrsqrt.pop %v570
    %v645 = vmul.f32 %v570, %v644
    %vm646 = vcmp.eq.f32.partialorder %v570, inf
    %v647 = vsel %vm646, %v570, %v645
    %vm648 = vcmp.eq.f32.partialorder %v570, 0.0
    %v649 = vand.u32 %v570, 2147483648
    %v650 = vsel %vm648, %v649, %v647
    %v651 = vmul.f32 %v80, %v650
    %v652 = vmax.f32 %v651, 1.1920929e-07
    %v653 = vrcp.pop %v652
    %v654 = vmul.f32 %v641, %v653
    %vm655 = vcmp.ge.f32.partialorder %v654, 0.0
    %v656 = vmul.f32 %v654, 0.01
    %v657 = vsel %vm655, %v654, %v656
    %v658 = vmul.f32 %v657, 1.442695
    %v659 = vpow.pop %v658
    %v661 = vsel %vm345, %v659, 0
    %663 = vmatprep.subr.mxu0 0.0
    %664 = vmatpush1.msra.mxu0 %v351
    %665 = vmatprep.subr.mxu0 0.0
    %666 = vmatpush1.msra.mxu0 0.0
    %667 = vmatprep.subr.mxu0 0.0
    %668 = vmatpush1.msra.mxu0 0.0
    %669 = vmatprep.subr.mxu0 0.0
    %670 = vmatpush1.msra.mxu0 0.0
    %671 = vmatprep.subr.mxu0 0.0
    %672 = vmatpush1.msra.mxu0 0.0
    %673 = vmatprep.subr.mxu0 0.0
    %674 = vmatpush1.msra.mxu0 0.0
    %675 = vmatprep.subr.mxu0 0.0
    %676 = vmatpush1.msra.mxu0 0.0
    %677 = vmatprep.subr.mxu0 0.0
    %678 = vmatpush1.msra.mxu0 0.0
    %679 = vmatprep.subr.mxu0 0.0
    %680 = vmatpush1.msra.mxu0 0.0
    %681 = vmatprep.subr.mxu0 0.0
    %682 = vmatpush1.msra.mxu0 0.0
    %683 = vmatprep.subr.mxu0 0.0
    %684 = vmatpush1.msra.mxu0 0.0
    %685 = vmatprep.subr.mxu0 0.0
    %686 = vmatpush1.msra.mxu0 0.0
    %687 = vmatprep.subr.mxu0 0.0
    %688 = vmatpush1.msra.mxu0 0.0
    %689 = vmatprep.subr.mxu0 0.0
    %690 = vmatpush1.msra.mxu0 0.0
    %691 = vmatprep.subr.mxu0 0.0
    %692 = vmatpush1.msra.mxu0 0.0
    %693 = vmatprep.subr.mxu0 0.0
    %694 = vmatpush1.msra.mxu0 0.0
    %695 = vmatprep.subr.mxu0 0.0
    %696 = vmatpush1.msra.mxu0 0.0
    %697 = vmatprep.subr.mxu0 0.0
    %698 = vmatpush1.msra.mxu0 0.0
    %699 = vmatprep.subr.mxu0 0.0
    %700 = vmatpush1.msra.mxu0 0.0
    %701 = vmatprep.subr.mxu0 0.0
    %702 = vmatpush1.msra.mxu0 0.0
    %703 = vmatprep.subr.mxu0 0.0
    %704 = vmatpush1.msra.mxu0 0.0
    %705 = vmatprep.subr.mxu0 0.0
    %706 = vmatpush1.msra.mxu0 0.0
    %707 = vmatprep.subr.mxu0 0.0
    %708 = vmatpush1.msra.mxu0 0.0
    %709 = vmatprep.subr.mxu0 0.0
    %710 = vmatpush1.msra.mxu0 0.0
    %711 = vmatprep.subr.mxu0 0.0
    %712 = vmatpush1.msra.mxu0 0.0
    %713 = vmatprep.subr.mxu0 0.0
    %714 = vmatpush1.msra.mxu0 0.0
    %715 = vmatprep.subr.mxu0 0.0
    %716 = vmatpush1.msra.mxu0 0.0
    %717 = vmatprep.subr.mxu0 0.0
    %718 = vmatpush1.msra.mxu0 0.0
    %719 = vmatprep.subr.mxu0 0.0
    %720 = vmatpush1.msra.mxu0 0.0
    %721 = vmatprep.subr.mxu0 0.0
    %722 = vmatpush1.msra.mxu0 0.0
    %723 = vmatprep.subr.mxu0 0.0
    %724 = vmatpush1.msra.mxu0 0.0
    %725 = vmatprep.subr.mxu0 0.0
    %726 = vmatpush1.msra.mxu0 0.0
    %727 = vmatprep.mubr.f32.mxu0 0.0
    %728 = vmatmul.mubr.f32.gmra.mrb[0].mxu0 %v661
    %v729 = vpop.f32.mrb[0].mxu0
    %v730 = vadd.f32 0.0, %v729
    %v731 = vpop.f32.mrb[0].mxu0
    %732 = vdwg.mxu0
    %v733 = vmul.f32 %v730, %v500
    %v734 = vadd.f32 %v424, %v733
    %v735 = vadd.f32 %v425, %v659
    %s736 = scalar_lea.vmem %s0, 16
    %v737 = vld [vmem:[%s736] sm:$0xff]
    %v739 = vsel %vm112, %v737, 0
    %741 = vmatprep.subr.mxu0 %v39
    %742 = vmatpush1.msra.mxu0 %v38
    %743 = vmatprep.subr.mxu0 %v41
    %744 = vmatpush1.msra.mxu0 %v40
    %745 = vmatprep.subr.mxu0 %v43
    %746 = vmatpush1.msra.mxu0 %v42
    %747 = vmatprep.subr.mxu0 %v45
    %748 = vmatpush1.msra.mxu0 %v44
    %749 = vmatprep.subr.mxu0 0.0
    %750 = vmatpush1.msra.mxu0 0.0
    %751 = vmatprep.subr.mxu0 0.0
    %752 = vmatpush1.msra.mxu0 0.0
    %753 = vmatprep.subr.mxu0 0.0
    %754 = vmatpush1.msra.mxu0 0.0
    %755 = vmatprep.subr.mxu0 0.0
    %756 = vmatpush1.msra.mxu0 0.0
    %757 = vmatprep.subr.mxu0 0.0
    %758 = vmatpush1.msra.mxu0 0.0
    %759 = vmatprep.subr.mxu0 0.0
    %760 = vmatpush1.msra.mxu0 0.0
    %761 = vmatprep.subr.mxu0 0.0
    %762 = vmatpush1.msra.mxu0 0.0
    %763 = vmatprep.subr.mxu0 0.0
    %764 = vmatpush1.msra.mxu0 0.0
    %765 = vmatprep.subr.mxu0 0.0
    %766 = vmatpush1.msra.mxu0 0.0
    %767 = vmatprep.subr.mxu0 0.0
    %768 = vmatpush1.msra.mxu0 0.0
    %769 = vmatprep.subr.mxu0 0.0
    %770 = vmatpush1.msra.mxu0 0.0
    %771 = vmatprep.subr.mxu0 0.0
    %772 = vmatpush1.msra.mxu0 0.0
    %773 = vmatprep.subr.mxu0 0.0
    %774 = vmatpush1.msra.mxu0 0.0
    %775 = vmatprep.subr.mxu0 0.0
    %776 = vmatpush1.msra.mxu0 0.0
    %777 = vmatprep.subr.mxu0 0.0
    %778 = vmatpush1.msra.mxu0 0.0
    %779 = vmatprep.subr.mxu0 0.0
    %780 = vmatpush1.msra.mxu0 0.0
    %781 = vmatprep.subr.mxu0 0.0
    %782 = vmatpush1.msra.mxu0 0.0
    %783 = vmatprep.subr.mxu0 0.0
    %784 = vmatpush1.msra.mxu0 0.0
    %785 = vmatprep.subr.mxu0 0.0
    %786 = vmatpush1.msra.mxu0 0.0
    %787 = vmatprep.subr.mxu0 0.0
    %788 = vmatpush1.msra.mxu0 0.0
    %789 = vmatprep.subr.mxu0 0.0
    %790 = vmatpush1.msra.mxu0 0.0
    %791 = vmatprep.subr.mxu0 0.0
    %792 = vmatpush1.msra.mxu0 0.0
    %793 = vmatprep.subr.mxu0 0.0
    %794 = vmatpush1.msra.mxu0 0.0
    %795 = vmatprep.subr.mxu0 0.0
    %796 = vmatpush1.msra.mxu0 0.0
    %797 = vmatprep.subr.mxu0 0.0
    %798 = vmatpush1.msra.mxu0 0.0
    %799 = vmatprep.subr.mxu0 0.0
    %800 = vmatpush1.msra.mxu0 0.0
    %801 = vmatprep.subr.mxu0 0.0
    %802 = vmatpush1.msra.mxu0 0.0
    %803 = vmatprep.subr.mxu0 0.0
    %804 = vmatpush1.msra.mxu0 0.0
    %805 = vmatprep.mubr.f32.mxu0 0.0
    %806 = vmatmul.mubr.f32.gmra.mrb[0].mxu0 %v739
    %v807 = vpop.f32.mrb[0].mxu0
    %v808 = vadd.f32 %v105, %v807
    %v809 = vpop.f32.mrb[0].mxu0
    %v810 = vadd.f32 %v109, %v809
    %811 = vdwg.mxu0
    %v812 = vmul.f32 %v808, %v808
    %813 = vmatprep.subr.mxu0 0.0
    %814 = vmatpush1.msra.mxu0 %v83
    %815 = vmatprep.subr.mxu0 0.0
    %816 = vmatpush1.msra.mxu0 %v84
    %817 = vmatprep.subr.mxu0 0.0
    %818 = vmatpush1.msra.mxu0 %v85
    %819 = vmatprep.subr.mxu0 0.0
    %820 = vmatpush1.msra.mxu0 %v86
    %821 = vmatprep.subr.mxu0 0.0
    %822 = vmatpush1.msra.mxu0 %v87
    %823 = vmatprep.subr.mxu0 0.0
    %824 = vmatpush1.msra.mxu0 %v88
    %825 = vmatprep.subr.mxu0 0.0
    %826 = vmatpush1.msra.mxu0 %v89
    %827 = vmatprep.subr.mxu0 0.0
    %828 = vmatpush1.msra.mxu0 %v90
    %829 = vmatprep.subr.mxu0 0.0
    %830 = vmatpush1.msra.mxu0 %v91
    %831 = vmatprep.subr.mxu0 0.0
    %832 = vmatpush1.msra.mxu0 %v92
    %833 = vmatprep.subr.mxu0 0.0
    %834 = vmatpush1.msra.mxu0 %v93
    %835 = vmatprep.subr.mxu0 0.0
    %836 = vmatpush1.msra.mxu0 %v94
    %837 = vmatprep.subr.mxu0 0.0
    %838 = vmatpush1.msra.mxu0 %v95
    %839 = vmatprep.subr.mxu0 0.0
    %840 = vmatpush1.msra.mxu0 %v96
    %841 = vmatprep.subr.mxu0 0.0
    %842 = vmatpush1.msra.mxu0 %v97
    %843 = vmatprep.subr.mxu0 0.0
    %844 = vmatpush1.msra.mxu0 %v98
    %845 = vmatprep.subr.mxu0 0.0
    %846 = vmatpush1.msra.mxu0 0.0
    %847 = vmatprep.subr.mxu0 0.0
    %848 = vmatpush1.msra.mxu0 0.0
    %849 = vmatprep.subr.mxu0 0.0
    %850 = vmatpush1.msra.mxu0 0.0
    %851 = vmatprep.subr.mxu0 0.0
    %852 = vmatpush1.msra.mxu0 0.0
    %853 = vmatprep.subr.mxu0 0.0
    %854 = vmatpush1.msra.mxu0 0.0
    %855 = vmatprep.subr.mxu0 0.0
    %856 = vmatpush1.msra.mxu0 0.0
    %857 = vmatprep.subr.mxu0 0.0
    %858 = vmatpush1.msra.mxu0 0.0
    %859 = vmatprep.subr.mxu0 0.0
    %860 = vmatpush1.msra.mxu0 0.0
    %861 = vmatprep.subr.mxu0 0.0
    %862 = vmatpush1.msra.mxu0 0.0
    %863 = vmatprep.subr.mxu0 0.0
    %864 = vmatpush1.msra.mxu0 0.0
    %865 = vmatprep.subr.mxu0 0.0
    %866 = vmatpush1.msra.mxu0 0.0
    %867 = vmatprep.subr.mxu0 0.0
    %868 = vmatpush1.msra.mxu0 0.0
    %869 = vmatprep.subr.mxu0 0.0
    %870 = vmatpush1.msra.mxu0 0.0
    %871 = vmatprep.subr.mxu0 0.0
    %872 = vmatpush1.msra.mxu0 0.0
    %873 = vmatprep.subr.mxu0 0.0
    %874 = vmatpush1.msra.mxu0 0.0
    %875 = vmatprep.subr.mxu0 0.0
    %876 = vmatpush1.msra.mxu0 0.0
    %877 = vmatprep.mubr.f32.mxu0 0.0
    %878 = vmatmul.mubr.f32.gmra.mrb[0].mxu0 %v812
    %v879 = vpop.f32.mrb[0].mxu0
    %v880 = vadd.f32 0.0, %v879
    %v881 = vpop.f32.mrb[0].mxu0
    %882 = vdwg.mxu0
    %v883 = vmul.f32 %v808, %v79
    %884 = vmatprep.subr.mxu0 0.0
    %885 = vmatpush1.msra.mxu0 %v83
    %886 = vmatprep.subr.mxu0 0.0
    %887 = vmatpush1.msra.mxu0 %v84
    %888 = vmatprep.subr.mxu0 0.0
    %889 = vmatpush1.msra.mxu0 %v85
    %890 = vmatprep.subr.mxu0 0.0
    %891 = vmatpush1.msra.mxu0 %v86
    %892 = vmatprep.subr.mxu0 0.0
    %893 = vmatpush1.msra.mxu0 %v87
    %894 = vmatprep.subr.mxu0 0.0
    %895 = vmatpush1.msra.mxu0 %v88
    %896 = vmatprep.subr.mxu0 0.0
    %897 = vmatpush1.msra.mxu0 %v89
    %898 = vmatprep.subr.mxu0 0.0
    %899 = vmatpush1.msra.mxu0 %v90
    %900 = vmatprep.subr.mxu0 0.0
    %901 = vmatpush1.msra.mxu0 %v91
    %902 = vmatprep.subr.mxu0 0.0
    %903 = vmatpush1.msra.mxu0 %v92
    %904 = vmatprep.subr.mxu0 0.0
    %905 = vmatpush1.msra.mxu0 %v93
    %906 = vmatprep.subr.mxu0 0.0
    %907 = vmatpush1.msra.mxu0 %v94
    %908 = vmatprep.subr.mxu0 0.0
    %909 = vmatpush1.msra.mxu0 %v95
    %910 = vmatprep.subr.mxu0 0.0
    %911 = vmatpush1.msra.mxu0 %v96
    %912 = vmatprep.subr.mxu0 0.0
    %913 = vmatpush1.msra.mxu0 %v97
    %914 = vmatprep.subr.mxu0 0.0
    %915 = vmatpush1.msra.mxu0 %v98
    %916 = vmatprep.subr.mxu0 0.0
    %917 = vmatpush1.msra.mxu0 0.0
    %918 = vmatprep.subr.mxu0 0.0
    %919 = vmatpush1.msra.mxu0 0.0
    %920 = vmatprep.subr.mxu0 0.0
    %921 = vmatpush1.msra.mxu0 0.0
    %922 = vmatprep.subr.mxu0 0.0
    %923 = vmatpush1.msra.mxu0 0.0
    %924 = vmatprep.subr.mxu0 0.0
    %925 = vmatpush1.msra.mxu0 0.0
    %926 = vmatprep.subr.mxu0 0.0
    %927 = vmatpush1.msra.mxu0 0.0
    %928 = vmatprep.subr.mxu0 0.0
    %929 = vmatpush1.msra.mxu0 0.0
    %930 = vmatprep.subr.mxu0 0.0
    %931 = vmatpush1.msra.mxu0 0.0
    %932 = vmatprep.subr.mxu0 0.0
    %933 = vmatpush1.msra.mxu0 0.0
    %934 = vmatprep.subr.mxu0 0.0
    %935 = vmatpush1.msra.mxu0 0.0
    %936 = vmatprep.subr.mxu0 0.0
    %937 = vmatpush1.msra.mxu0 0.0
    %938 = vmatprep.subr.mxu0 0.0
    %939 = vmatpush1.msra.mxu0 0.0
    %940 = vmatprep.subr.mxu0 0.0
    %941 = vmatpush1.msra.mxu0 0.0
    %942 = vmatprep.subr.mxu0 0.0
    %943 = vmatpush1.msra.mxu0 0.0
    %944 = vmatprep.subr.mxu0 0.0
    %945 = vmatpush1.msra.mxu0 0.0
    %946 = vmatprep.subr.mxu0 0.0
    %947 = vmatpush1.msra.mxu0 0.0
    %948 = vmatprep.mubr.f32.mxu0 0.0
    %949 = vmatmul.mubr.f32.gmra.mrb[0].mxu0 %v883
    %v950 = vpop.f32.mrb[0].mxu0
    %v951 = vadd.f32 0.0, %v950
    %v952 = vpop.f32.mrb[0].mxu0
    %953 = vdwg.mxu0
    %v954 = vrsqrt.pop %v880
    %v955 = vmul.f32 %v880, %v954
    %vm956 = vcmp.eq.f32.partialorder %v880, inf
    %v957 = vsel %vm956, %v880, %v955
    %vm958 = vcmp.eq.f32.partialorder %v880, 0.0
    %v959 = vand.u32 %v880, 2147483648
    %v960 = vsel %vm958, %v959, %v957
    %v961 = vmul.f32 %v80, %v960
    %v962 = vmax.f32 %v961, 1.1920929e-07
    %v963 = vrcp.pop %v962
    %v964 = vmul.f32 %v951, %v963
    %vm965 = vcmp.ge.f32.partialorder %v964, 0.0
    %v966 = vmul.f32 %v964, 0.01
    %v967 = vsel %vm965, %v964, %v966
    %v968 = vmul.f32 %v967, 1.442695
    %v969 = vpow.pop %v968
    %v971 = vsel %vm345, %v969, 0
    %973 = vmatprep.subr.mxu0 0.0
    %974 = vmatpush1.msra.mxu0 %v351
    %975 = vmatprep.subr.mxu0 0.0
    %976 = vmatpush1.msra.mxu0 0.0
    %977 = vmatprep.subr.mxu0 0.0
    %978 = vmatpush1.msra.mxu0 0.0
    %979 = vmatprep.subr.mxu0 0.0
    %980 = vmatpush1.msra.mxu0 0.0
    %981 = vmatprep.subr.mxu0 0.0
    %982 = vmatpush1.msra.mxu0 0.0
    %983 = vmatprep.subr.mxu0 0.0
    %984 = vmatpush1.msra.mxu0 0.0
    %985 = vmatprep.subr.mxu0 0.0
    %986 = vmatpush1.msra.mxu0 0.0
    %987 = vmatprep.subr.mxu0 0.0
    %988 = vmatpush1.msra.mxu0 0.0
    %989 = vmatprep.subr.mxu0 0.0
    %990 = vmatpush1.msra.mxu0 0.0
    %991 = vmatprep.subr.mxu0 0.0
    %992 = vmatpush1.msra.mxu0 0.0
    %993 = vmatprep.subr.mxu0 0.0
    %994 = vmatpush1.msra.mxu0 0.0
    %995 = vmatprep.subr.mxu0 0.0
    %996 = vmatpush1.msra.mxu0 0.0
    %997 = vmatprep.subr.mxu0 0.0
    %998 = vmatpush1.msra.mxu0 0.0
    %999 = vmatprep.subr.mxu0 0.0
    %1000 = vmatpush1.msra.mxu0 0.0
    %1001 = vmatprep.subr.mxu0 0.0
    %1002 = vmatpush1.msra.mxu0 0.0
    %1003 = vmatprep.subr.mxu0 0.0
    %1004 = vmatpush1.msra.mxu0 0.0
    %1005 = vmatprep.subr.mxu0 0.0
    %1006 = vmatpush1.msra.mxu0 0.0
    %1007 = vmatprep.subr.mxu0 0.0
    %1008 = vmatpush1.msra.mxu0 0.0
    %1009 = vmatprep.subr.mxu0 0.0
    %1010 = vmatpush1.msra.mxu0 0.0
    %1011 = vmatprep.subr.mxu0 0.0
    %1012 = vmatpush1.msra.mxu0 0.0
    %1013 = vmatprep.subr.mxu0 0.0
    %1014 = vmatpush1.msra.mxu0 0.0
    %1015 = vmatprep.subr.mxu0 0.0
    %1016 = vmatpush1.msra.mxu0 0.0
    %1017 = vmatprep.subr.mxu0 0.0
    %1018 = vmatpush1.msra.mxu0 0.0
    %1019 = vmatprep.subr.mxu0 0.0
    %1020 = vmatpush1.msra.mxu0 0.0
    %1021 = vmatprep.subr.mxu0 0.0
    %1022 = vmatpush1.msra.mxu0 0.0
    %1023 = vmatprep.subr.mxu0 0.0
    %1024 = vmatpush1.msra.mxu0 0.0
    %1025 = vmatprep.subr.mxu0 0.0
    %1026 = vmatpush1.msra.mxu0 0.0
    %1027 = vmatprep.subr.mxu0 0.0
    %1028 = vmatpush1.msra.mxu0 0.0
    %1029 = vmatprep.subr.mxu0 0.0
    %1030 = vmatpush1.msra.mxu0 0.0
    %1031 = vmatprep.subr.mxu0 0.0
    %1032 = vmatpush1.msra.mxu0 0.0
    %1033 = vmatprep.subr.mxu0 0.0
    %1034 = vmatpush1.msra.mxu0 0.0
    %1035 = vmatprep.subr.mxu0 0.0
    %1036 = vmatpush1.msra.mxu0 0.0
    %1037 = vmatprep.mubr.f32.mxu0 0.0
    %1038 = vmatmul.mubr.f32.gmra.mrb[0].mxu0 %v971
    %v1039 = vpop.f32.mrb[0].mxu0
    %v1040 = vadd.f32 0.0, %v1039
    %v1041 = vpop.f32.mrb[0].mxu0
    %1042 = vdwg.mxu0
    %v1043 = vmul.f32 %v1040, %v810
    %v1044 = vadd.f32 %v734, %v1043
    %v1045 = vadd.f32 %v735, %v969
    %s1046 = scalar_lea.vmem %s0, 24
    %v1047 = vld [vmem:[%s1046] sm:$0xff]
    %v1049 = vsel %vm112, %v1047, 0
    %1051 = vmatprep.subr.mxu0 %v39
    %1052 = vmatpush1.msra.mxu0 %v38
    %1053 = vmatprep.subr.mxu0 %v41
    %1054 = vmatpush1.msra.mxu0 %v40
    %1055 = vmatprep.subr.mxu0 %v43
    %1056 = vmatpush1.msra.mxu0 %v42
    %1057 = vmatprep.subr.mxu0 %v45
    %1058 = vmatpush1.msra.mxu0 %v44
    %1059 = vmatprep.subr.mxu0 0.0
    %1060 = vmatpush1.msra.mxu0 0.0
    %1061 = vmatprep.subr.mxu0 0.0
    %1062 = vmatpush1.msra.mxu0 0.0
    %1063 = vmatprep.subr.mxu0 0.0
    %1064 = vmatpush1.msra.mxu0 0.0
    %1065 = vmatprep.subr.mxu0 0.0
    %1066 = vmatpush1.msra.mxu0 0.0
    %1067 = vmatprep.subr.mxu0 0.0
    %1068 = vmatpush1.msra.mxu0 0.0
    %1069 = vmatprep.subr.mxu0 0.0
    %1070 = vmatpush1.msra.mxu0 0.0
    %1071 = vmatprep.subr.mxu0 0.0
    %1072 = vmatpush1.msra.mxu0 0.0
    %1073 = vmatprep.subr.mxu0 0.0
    %1074 = vmatpush1.msra.mxu0 0.0
    %1075 = vmatprep.subr.mxu0 0.0
    %1076 = vmatpush1.msra.mxu0 0.0
    %1077 = vmatprep.subr.mxu0 0.0
    %1078 = vmatpush1.msra.mxu0 0.0
    %1079 = vmatprep.subr.mxu0 0.0
    %1080 = vmatpush1.msra.mxu0 0.0
    %1081 = vmatprep.subr.mxu0 0.0
    %1082 = vmatpush1.msra.mxu0 0.0
    %1083 = vmatprep.subr.mxu0 0.0
    %1084 = vmatpush1.msra.mxu0 0.0
    %1085 = vmatprep.subr.mxu0 0.0
    %1086 = vmatpush1.msra.mxu0 0.0
    %1087 = vmatprep.subr.mxu0 0.0
    %1088 = vmatpush1.msra.mxu0 0.0
    %1089 = vmatprep.subr.mxu0 0.0
    %1090 = vmatpush1.msra.mxu0 0.0
    %1091 = vmatprep.subr.mxu0 0.0
    %1092 = vmatpush1.msra.mxu0 0.0
    %1093 = vmatprep.subr.mxu0 0.0
    %1094 = vmatpush1.msra.mxu0 0.0
    %1095 = vmatprep.subr.mxu0 0.0
    %1096 = vmatpush1.msra.mxu0 0.0
    %1097 = vmatprep.subr.mxu0 0.0
    %1098 = vmatpush1.msra.mxu0 0.0
    %1099 = vmatprep.subr.mxu0 0.0
    %1100 = vmatpush1.msra.mxu0 0.0
    %1101 = vmatprep.subr.mxu0 0.0
    %1102 = vmatpush1.msra.mxu0 0.0
    %1103 = vmatprep.subr.mxu0 0.0
    %1104 = vmatpush1.msra.mxu0 0.0
    %1105 = vmatprep.subr.mxu0 0.0
    %1106 = vmatpush1.msra.mxu0 0.0
    %1107 = vmatprep.subr.mxu0 0.0
    %1108 = vmatpush1.msra.mxu0 0.0
    %1109 = vmatprep.subr.mxu0 0.0
    %1110 = vmatpush1.msra.mxu0 0.0
    %1111 = vmatprep.subr.mxu0 0.0
    %1112 = vmatpush1.msra.mxu0 0.0
    %1113 = vmatprep.subr.mxu0 0.0
    %1114 = vmatpush1.msra.mxu0 0.0
    %1115 = vmatprep.mubr.f32.mxu0 0.0
    %1116 = vmatmul.mubr.f32.gmra.mrb[0].mxu0 %v1049
    %v1117 = vpop.f32.mrb[0].mxu0
    %v1118 = vadd.f32 %v105, %v1117
    %v1119 = vpop.f32.mrb[0].mxu0
    %v1120 = vadd.f32 %v109, %v1119
    %1121 = vdwg.mxu0
    %v1122 = vmul.f32 %v1118, %v1118
    %1123 = vmatprep.subr.mxu0 0.0
    %1124 = vmatpush1.msra.mxu0 %v83
    %1125 = vmatprep.subr.mxu0 0.0
    %1126 = vmatpush1.msra.mxu0 %v84
    %1127 = vmatprep.subr.mxu0 0.0
    %1128 = vmatpush1.msra.mxu0 %v85
    %1129 = vmatprep.subr.mxu0 0.0
    %1130 = vmatpush1.msra.mxu0 %v86
    %1131 = vmatprep.subr.mxu0 0.0
    %1132 = vmatpush1.msra.mxu0 %v87
    %1133 = vmatprep.subr.mxu0 0.0
    %1134 = vmatpush1.msra.mxu0 %v88
    %1135 = vmatprep.subr.mxu0 0.0
    %1136 = vmatpush1.msra.mxu0 %v89
    %1137 = vmatprep.subr.mxu0 0.0
    %1138 = vmatpush1.msra.mxu0 %v90
    %1139 = vmatprep.subr.mxu0 0.0
    %1140 = vmatpush1.msra.mxu0 %v91
    %1141 = vmatprep.subr.mxu0 0.0
    %1142 = vmatpush1.msra.mxu0 %v92
    %1143 = vmatprep.subr.mxu0 0.0
    %1144 = vmatpush1.msra.mxu0 %v93
    %1145 = vmatprep.subr.mxu0 0.0
    %1146 = vmatpush1.msra.mxu0 %v94
    %1147 = vmatprep.subr.mxu0 0.0
    %1148 = vmatpush1.msra.mxu0 %v95
    %1149 = vmatprep.subr.mxu0 0.0
    %1150 = vmatpush1.msra.mxu0 %v96
    %1151 = vmatprep.subr.mxu0 0.0
    %1152 = vmatpush1.msra.mxu0 %v97
    %1153 = vmatprep.subr.mxu0 0.0
    %1154 = vmatpush1.msra.mxu0 %v98
    %1155 = vmatprep.subr.mxu0 0.0
    %1156 = vmatpush1.msra.mxu0 0.0
    %1157 = vmatprep.subr.mxu0 0.0
    %1158 = vmatpush1.msra.mxu0 0.0
    %1159 = vmatprep.subr.mxu0 0.0
    %1160 = vmatpush1.msra.mxu0 0.0
    %1161 = vmatprep.subr.mxu0 0.0
    %1162 = vmatpush1.msra.mxu0 0.0
    %1163 = vmatprep.subr.mxu0 0.0
    %1164 = vmatpush1.msra.mxu0 0.0
    %1165 = vmatprep.subr.mxu0 0.0
    %1166 = vmatpush1.msra.mxu0 0.0
    %1167 = vmatprep.subr.mxu0 0.0
    %1168 = vmatpush1.msra.mxu0 0.0
    %1169 = vmatprep.subr.mxu0 0.0
    %1170 = vmatpush1.msra.mxu0 0.0
    %1171 = vmatprep.subr.mxu0 0.0
    %1172 = vmatpush1.msra.mxu0 0.0
    %1173 = vmatprep.subr.mxu0 0.0
    %1174 = vmatpush1.msra.mxu0 0.0
    %1175 = vmatprep.subr.mxu0 0.0
    %1176 = vmatpush1.msra.mxu0 0.0
    %1177 = vmatprep.subr.mxu0 0.0
    %1178 = vmatpush1.msra.mxu0 0.0
    %1179 = vmatprep.subr.mxu0 0.0
    %1180 = vmatpush1.msra.mxu0 0.0
    %1181 = vmatprep.subr.mxu0 0.0
    %1182 = vmatpush1.msra.mxu0 0.0
    %1183 = vmatprep.subr.mxu0 0.0
    %1184 = vmatpush1.msra.mxu0 0.0
    %1185 = vmatprep.subr.mxu0 0.0
    %1186 = vmatpush1.msra.mxu0 0.0
    %1187 = vmatprep.mubr.f32.mxu0 0.0
    %1188 = vmatmul.mubr.f32.gmra.mrb[0].mxu0 %v1122
    %v1189 = vpop.f32.mrb[0].mxu0
    %v1190 = vadd.f32 0.0, %v1189
    %v1191 = vpop.f32.mrb[0].mxu0
    %1192 = vdwg.mxu0
    %v1193 = vmul.f32 %v1118, %v79
    %1194 = vmatprep.subr.mxu0 0.0
    %1195 = vmatpush1.msra.mxu0 %v83
    %1196 = vmatprep.subr.mxu0 0.0
    %1197 = vmatpush1.msra.mxu0 %v84
    %1198 = vmatprep.subr.mxu0 0.0
    %1199 = vmatpush1.msra.mxu0 %v85
    %1200 = vmatprep.subr.mxu0 0.0
    %1201 = vmatpush1.msra.mxu0 %v86
    %1202 = vmatprep.subr.mxu0 0.0
    %1203 = vmatpush1.msra.mxu0 %v87
    %1204 = vmatprep.subr.mxu0 0.0
    %1205 = vmatpush1.msra.mxu0 %v88
    %1206 = vmatprep.subr.mxu0 0.0
    %1207 = vmatpush1.msra.mxu0 %v89
    %1208 = vmatprep.subr.mxu0 0.0
    %1209 = vmatpush1.msra.mxu0 %v90
    %1210 = vmatprep.subr.mxu0 0.0
    %1211 = vmatpush1.msra.mxu0 %v91
    %1212 = vmatprep.subr.mxu0 0.0
    %1213 = vmatpush1.msra.mxu0 %v92
    %1214 = vmatprep.subr.mxu0 0.0
    %1215 = vmatpush1.msra.mxu0 %v93
    %1216 = vmatprep.subr.mxu0 0.0
    %1217 = vmatpush1.msra.mxu0 %v94
    %1218 = vmatprep.subr.mxu0 0.0
    %1219 = vmatpush1.msra.mxu0 %v95
    %1220 = vmatprep.subr.mxu0 0.0
    %1221 = vmatpush1.msra.mxu0 %v96
    %1222 = vmatprep.subr.mxu0 0.0
    %1223 = vmatpush1.msra.mxu0 %v97
    %1224 = vmatprep.subr.mxu0 0.0
    %1225 = vmatpush1.msra.mxu0 %v98
    %1226 = vmatprep.subr.mxu0 0.0
    %1227 = vmatpush1.msra.mxu0 0.0
    %1228 = vmatprep.subr.mxu0 0.0
    %1229 = vmatpush1.msra.mxu0 0.0
    %1230 = vmatprep.subr.mxu0 0.0
    %1231 = vmatpush1.msra.mxu0 0.0
    %1232 = vmatprep.subr.mxu0 0.0
    %1233 = vmatpush1.msra.mxu0 0.0
    %1234 = vmatprep.subr.mxu0 0.0
    %1235 = vmatpush1.msra.mxu0 0.0
    %1236 = vmatprep.subr.mxu0 0.0
    %1237 = vmatpush1.msra.mxu0 0.0
    %1238 = vmatprep.subr.mxu0 0.0
    %1239 = vmatpush1.msra.mxu0 0.0
    %1240 = vmatprep.subr.mxu0 0.0
    %1241 = vmatpush1.msra.mxu0 0.0
    %1242 = vmatprep.subr.mxu0 0.0
    %1243 = vmatpush1.msra.mxu0 0.0
    %1244 = vmatprep.subr.mxu0 0.0
    %1245 = vmatpush1.msra.mxu0 0.0
    %1246 = vmatprep.subr.mxu0 0.0
    %1247 = vmatpush1.msra.mxu0 0.0
    %1248 = vmatprep.subr.mxu0 0.0
    %1249 = vmatpush1.msra.mxu0 0.0
    %1250 = vmatprep.subr.mxu0 0.0
    %1251 = vmatpush1.msra.mxu0 0.0
    %1252 = vmatprep.subr.mxu0 0.0
    %1253 = vmatpush1.msra.mxu0 0.0
    %1254 = vmatprep.subr.mxu0 0.0
    %1255 = vmatpush1.msra.mxu0 0.0
    %1256 = vmatprep.subr.mxu0 0.0
    %1257 = vmatpush1.msra.mxu0 0.0
    %1258 = vmatprep.mubr.f32.mxu0 0.0
    %1259 = vmatmul.mubr.f32.gmra.mrb[0].mxu0 %v1193
    %v1260 = vpop.f32.mrb[0].mxu0
    %v1261 = vadd.f32 0.0, %v1260
    %v1262 = vpop.f32.mrb[0].mxu0
    %1263 = vdwg.mxu0
    %v1264 = vrsqrt.pop %v1190
    %v1265 = vmul.f32 %v1190, %v1264
    %vm1266 = vcmp.eq.f32.partialorder %v1190, inf
    %v1267 = vsel %vm1266, %v1190, %v1265
    %vm1268 = vcmp.eq.f32.partialorder %v1190, 0.0
    %v1269 = vand.u32 %v1190, 2147483648
    %v1270 = vsel %vm1268, %v1269, %v1267
    %v1271 = vmul.f32 %v80, %v1270
    %v1272 = vmax.f32 %v1271, 1.1920929e-07
    %v1273 = vrcp.pop %v1272
    %v1274 = vmul.f32 %v1261, %v1273
    %vm1275 = vcmp.ge.f32.partialorder %v1274, 0.0
    %v1276 = vmul.f32 %v1274, 0.01
    %v1277 = vsel %vm1275, %v1274, %v1276
    %v1278 = vmul.f32 %v1277, 1.442695
    %v1279 = vpow.pop %v1278
    %v1281 = vsel %vm345, %v1279, 0
    %1283 = vmatprep.subr.mxu0 0.0
    %1284 = vmatpush1.msra.mxu0 %v351
    %1285 = vmatprep.subr.mxu0 0.0
    %1286 = vmatpush1.msra.mxu0 0.0
    %1287 = vmatprep.subr.mxu0 0.0
    %1288 = vmatpush1.msra.mxu0 0.0
    %1289 = vmatprep.subr.mxu0 0.0
    %1290 = vmatpush1.msra.mxu0 0.0
    %1291 = vmatprep.subr.mxu0 0.0
    %1292 = vmatpush1.msra.mxu0 0.0
    %1293 = vmatprep.subr.mxu0 0.0
    %1294 = vmatpush1.msra.mxu0 0.0
    %1295 = vmatprep.subr.mxu0 0.0
    %1296 = vmatpush1.msra.mxu0 0.0
    %1297 = vmatprep.subr.mxu0 0.0
    %1298 = vmatpush1.msra.mxu0 0.0
    %1299 = vmatprep.subr.mxu0 0.0
    %1300 = vmatpush1.msra.mxu0 0.0
    %1301 = vmatprep.subr.mxu0 0.0
    %1302 = vmatpush1.msra.mxu0 0.0
    %1303 = vmatprep.subr.mxu0 0.0
    %1304 = vmatpush1.msra.mxu0 0.0
    %1305 = vmatprep.subr.mxu0 0.0
    %1306 = vmatpush1.msra.mxu0 0.0
    %1307 = vmatprep.subr.mxu0 0.0
    %1308 = vmatpush1.msra.mxu0 0.0
    %1309 = vmatprep.subr.mxu0 0.0
    %1310 = vmatpush1.msra.mxu0 0.0
    %1311 = vmatprep.subr.mxu0 0.0
    %1312 = vmatpush1.msra.mxu0 0.0
    %1313 = vmatprep.subr.mxu0 0.0
    %1314 = vmatpush1.msra.mxu0 0.0
    %1315 = vmatprep.subr.mxu0 0.0
    %1316 = vmatpush1.msra.mxu0 0.0
    %1317 = vmatprep.subr.mxu0 0.0
    %1318 = vmatpush1.msra.mxu0 0.0
    %1319 = vmatprep.subr.mxu0 0.0
    %1320 = vmatpush1.msra.mxu0 0.0
    %1321 = vmatprep.subr.mxu0 0.0
    %1322 = vmatpush1.msra.mxu0 0.0
    %1323 = vmatprep.subr.mxu0 0.0
    %1324 = vmatpush1.msra.mxu0 0.0
    %1325 = vmatprep.subr.mxu0 0.0
    %1326 = vmatpush1.msra.mxu0 0.0
    %1327 = vmatprep.subr.mxu0 0.0
    %1328 = vmatpush1.msra.mxu0 0.0
    %1329 = vmatprep.subr.mxu0 0.0
    %1330 = vmatpush1.msra.mxu0 0.0
    %1331 = vmatprep.subr.mxu0 0.0
    %1332 = vmatpush1.msra.mxu0 0.0
    %1333 = vmatprep.subr.mxu0 0.0
    %1334 = vmatpush1.msra.mxu0 0.0
    %1335 = vmatprep.subr.mxu0 0.0
    %1336 = vmatpush1.msra.mxu0 0.0
    %1337 = vmatprep.subr.mxu0 0.0
    %1338 = vmatpush1.msra.mxu0 0.0
    %1339 = vmatprep.subr.mxu0 0.0
    %1340 = vmatpush1.msra.mxu0 0.0
    %1341 = vmatprep.subr.mxu0 0.0
    %1342 = vmatpush1.msra.mxu0 0.0
    %1343 = vmatprep.subr.mxu0 0.0
    %1344 = vmatpush1.msra.mxu0 0.0
    %1345 = vmatprep.subr.mxu0 0.0
    %1346 = vmatpush1.msra.mxu0 0.0
    %1347 = vmatprep.mubr.f32.mxu0 0.0
    %1348 = vmatmul.mubr.f32.gmra.mrb[0].mxu0 %v1281
    %v1349 = vpop.f32.mrb[0].mxu0
    %v1350 = vadd.f32 0.0, %v1349
    %v1351 = vpop.f32.mrb[0].mxu0
    %1352 = vdwg.mxu0
    %v1353 = vmul.f32 %v1350, %v1120
    %v1354 = vadd.f32 %v1044, %v1353
    %v1355 = vadd.f32 %v1045, %v1279
    %v1357 = vsel %vm345, %v1355, 0
    %1359 = vmatprep.subr.mxu0 0.0
    %1360 = vmatpush1.msra.mxu0 %v351
    %1361 = vmatprep.subr.mxu0 0.0
    %1362 = vmatpush1.msra.mxu0 0.0
    %1363 = vmatprep.subr.mxu0 0.0
    %1364 = vmatpush1.msra.mxu0 0.0
    %1365 = vmatprep.subr.mxu0 0.0
    %1366 = vmatpush1.msra.mxu0 0.0
    %1367 = vmatprep.subr.mxu0 0.0
    %1368 = vmatpush1.msra.mxu0 0.0
    %1369 = vmatprep.subr.mxu0 0.0
    %1370 = vmatpush1.msra.mxu0 0.0
    %1371 = vmatprep.subr.mxu0 0.0
    %1372 = vmatpush1.msra.mxu0 0.0
    %1373 = vmatprep.subr.mxu0 0.0
    %1374 = vmatpush1.msra.mxu0 0.0
    %1375 = vmatprep.subr.mxu0 0.0
    %1376 = vmatpush1.msra.mxu0 0.0
    %1377 = vmatprep.subr.mxu0 0.0
    %1378 = vmatpush1.msra.mxu0 0.0
    %1379 = vmatprep.subr.mxu0 0.0
    %1380 = vmatpush1.msra.mxu0 0.0
    %1381 = vmatprep.subr.mxu0 0.0
    %1382 = vmatpush1.msra.mxu0 0.0
    %1383 = vmatprep.subr.mxu0 0.0
    %1384 = vmatpush1.msra.mxu0 0.0
    %1385 = vmatprep.subr.mxu0 0.0
    %1386 = vmatpush1.msra.mxu0 0.0
    %1387 = vmatprep.subr.mxu0 0.0
    %1388 = vmatpush1.msra.mxu0 0.0
    %1389 = vmatprep.subr.mxu0 0.0
    %1390 = vmatpush1.msra.mxu0 0.0
    %1391 = vmatprep.subr.mxu0 0.0
    %1392 = vmatpush1.msra.mxu0 0.0
    %1393 = vmatprep.subr.mxu0 0.0
    %1394 = vmatpush1.msra.mxu0 0.0
    %1395 = vmatprep.subr.mxu0 0.0
    %1396 = vmatpush1.msra.mxu0 0.0
    %1397 = vmatprep.subr.mxu0 0.0
    %1398 = vmatpush1.msra.mxu0 0.0
    %1399 = vmatprep.subr.mxu0 0.0
    %1400 = vmatpush1.msra.mxu0 0.0
    %1401 = vmatprep.subr.mxu0 0.0
    %1402 = vmatpush1.msra.mxu0 0.0
    %1403 = vmatprep.subr.mxu0 0.0
    %1404 = vmatpush1.msra.mxu0 0.0
    %1405 = vmatprep.subr.mxu0 0.0
    %1406 = vmatpush1.msra.mxu0 0.0
    %1407 = vmatprep.subr.mxu0 0.0
    %1408 = vmatpush1.msra.mxu0 0.0
    %1409 = vmatprep.subr.mxu0 0.0
    %1410 = vmatpush1.msra.mxu0 0.0
    %1411 = vmatprep.subr.mxu0 0.0
    %1412 = vmatpush1.msra.mxu0 0.0
    %1413 = vmatprep.subr.mxu0 0.0
    %1414 = vmatpush1.msra.mxu0 0.0
    %1415 = vmatprep.subr.mxu0 0.0
    %1416 = vmatpush1.msra.mxu0 0.0
    %1417 = vmatprep.subr.mxu0 0.0
    %1418 = vmatpush1.msra.mxu0 0.0
    %1419 = vmatprep.subr.mxu0 0.0
    %1420 = vmatpush1.msra.mxu0 0.0
    %1421 = vmatprep.subr.mxu0 0.0
    %1422 = vmatpush1.msra.mxu0 0.0
    %1423 = vmatprep.mubr.f32.mxu0 0.0
    %1424 = vmatmul.mubr.f32.gmra.mrb[0].mxu0 %v1357
    %v1425 = vpop.f32.mrb[0].mxu0
    %v1426 = vadd.f32 0.0, %v1425
    %v1427 = vpop.f32.mrb[0].mxu0
    %1428 = vdwg.mxu0
    %v1429 = vrcp.pop %v1426
    %v1430 = vmul.f32 %v1354, %v1429
    %1431 = vmatprep.subr.mxu0 0.0
    %1432 = vmatpush1.msra.mxu0 %v46
    %1433 = vmatprep.subr.mxu0 0.0
    %1434 = vmatpush1.msra.mxu0 %v47
    %1435 = vmatprep.subr.mxu0 0.0
    %1436 = vmatpush1.msra.mxu0 %v48
    %1437 = vmatprep.subr.mxu0 0.0
    %1438 = vmatpush1.msra.mxu0 %v49
    %1439 = vmatprep.subr.mxu0 0.0
    %1440 = vmatpush1.msra.mxu0 %v50
    %1441 = vmatprep.subr.mxu0 0.0
    %1442 = vmatpush1.msra.mxu0 %v51
    %1443 = vmatprep.subr.mxu0 0.0
    %1444 = vmatpush1.msra.mxu0 %v52
    %1445 = vmatprep.subr.mxu0 0.0
    %1446 = vmatpush1.msra.mxu0 %v53
    %1447 = vmatprep.subr.mxu0 0.0
    %1448 = vmatpush1.msra.mxu0 %v54
    %1449 = vmatprep.subr.mxu0 0.0
    %1450 = vmatpush1.msra.mxu0 %v55
    %1451 = vmatprep.subr.mxu0 0.0
    %1452 = vmatpush1.msra.mxu0 %v56
    %1453 = vmatprep.subr.mxu0 0.0
    %1454 = vmatpush1.msra.mxu0 %v57
    %1455 = vmatprep.subr.mxu0 0.0
    %1456 = vmatpush1.msra.mxu0 %v58
    %1457 = vmatprep.subr.mxu0 0.0
    %1458 = vmatpush1.msra.mxu0 %v59
    %1459 = vmatprep.subr.mxu0 0.0
    %1460 = vmatpush1.msra.mxu0 %v60
    %1461 = vmatprep.subr.mxu0 0.0
    %1462 = vmatpush1.msra.mxu0 %v61
    %1463 = vmatprep.subr.mxu0 0.0
    %1464 = vmatpush1.msra.mxu0 0.0
    %1465 = vmatprep.subr.mxu0 0.0
    %1466 = vmatpush1.msra.mxu0 0.0
    %1467 = vmatprep.subr.mxu0 0.0
    %1468 = vmatpush1.msra.mxu0 0.0
    %1469 = vmatprep.subr.mxu0 0.0
    %1470 = vmatpush1.msra.mxu0 0.0
    %1471 = vmatprep.subr.mxu0 0.0
    %1472 = vmatpush1.msra.mxu0 0.0
    %1473 = vmatprep.subr.mxu0 0.0
    %1474 = vmatpush1.msra.mxu0 0.0
    %1475 = vmatprep.subr.mxu0 0.0
    %1476 = vmatpush1.msra.mxu0 0.0
    %1477 = vmatprep.subr.mxu0 0.0
    %1478 = vmatpush1.msra.mxu0 0.0
    %1479 = vmatprep.subr.mxu0 0.0
    %1480 = vmatpush1.msra.mxu0 0.0
    %1481 = vmatprep.subr.mxu0 0.0
    %1482 = vmatpush1.msra.mxu0 0.0
    %1483 = vmatprep.subr.mxu0 0.0
    %1484 = vmatpush1.msra.mxu0 0.0
    %1485 = vmatprep.subr.mxu0 0.0
    %1486 = vmatpush1.msra.mxu0 0.0
    %1487 = vmatprep.subr.mxu0 0.0
    %1488 = vmatpush1.msra.mxu0 0.0
    %1489 = vmatprep.subr.mxu0 0.0
    %1490 = vmatpush1.msra.mxu0 0.0
    %1491 = vmatprep.subr.mxu0 0.0
    %1492 = vmatpush1.msra.mxu0 0.0
    %1493 = vmatprep.subr.mxu0 0.0
    %1494 = vmatpush1.msra.mxu0 0.0
    %1495 = vmatprep.mubr.f32.mxu0 0.0
    %1496 = vmatmul.mubr.f32.gmra.mrb[0].mxu0 %v1430
    %v1497 = vpop.f32.mrb[0].mxu0
    %v1498 = vadd.f32 %v81, %v1497
    %v1499 = vpop.f32.mrb[0].mxu0
    %1500 = vdwg.mxu0
    %vm1501 = vcmp.ge.f32.partialorder %v1498, 0.0
    %v1502 = vmul.f32 %v1498, 0.01
    %v1503 = vsel %vm1501, %v1498, %v1502
    %1504 = vmatprep.subr.mxu0 0.0
    %1505 = vmatpush1.msra.mxu0 %v62
    %1506 = vmatprep.subr.mxu0 0.0
    %1507 = vmatpush1.msra.mxu0 %v63
    %1508 = vmatprep.subr.mxu0 0.0
    %1509 = vmatpush1.msra.mxu0 %v64
    %1510 = vmatprep.subr.mxu0 0.0
    %1511 = vmatpush1.msra.mxu0 %v65
    %1512 = vmatprep.subr.mxu0 0.0
    %1513 = vmatpush1.msra.mxu0 %v66
    %1514 = vmatprep.subr.mxu0 0.0
    %1515 = vmatpush1.msra.mxu0 %v67
    %1516 = vmatprep.subr.mxu0 0.0
    %1517 = vmatpush1.msra.mxu0 %v68
    %1518 = vmatprep.subr.mxu0 0.0
    %1519 = vmatpush1.msra.mxu0 %v69
    %1520 = vmatprep.subr.mxu0 0.0
    %1521 = vmatpush1.msra.mxu0 %v70
    %1522 = vmatprep.subr.mxu0 0.0
    %1523 = vmatpush1.msra.mxu0 %v71
    %1524 = vmatprep.subr.mxu0 0.0
    %1525 = vmatpush1.msra.mxu0 %v72
    %1526 = vmatprep.subr.mxu0 0.0
    %1527 = vmatpush1.msra.mxu0 %v73
    %1528 = vmatprep.subr.mxu0 0.0
    %1529 = vmatpush1.msra.mxu0 %v74
    %1530 = vmatprep.subr.mxu0 0.0
    %1531 = vmatpush1.msra.mxu0 %v75
    %1532 = vmatprep.subr.mxu0 0.0
    %1533 = vmatpush1.msra.mxu0 %v76
    %1534 = vmatprep.subr.mxu0 0.0
    %1535 = vmatpush1.msra.mxu0 %v77
    %1536 = vmatprep.subr.mxu0 0.0
    %1537 = vmatpush1.msra.mxu0 0.0
    %1538 = vmatprep.subr.mxu0 0.0
    %1539 = vmatpush1.msra.mxu0 0.0
    %1540 = vmatprep.subr.mxu0 0.0
    %1541 = vmatpush1.msra.mxu0 0.0
    %1542 = vmatprep.subr.mxu0 0.0
    %1543 = vmatpush1.msra.mxu0 0.0
    %1544 = vmatprep.subr.mxu0 0.0
    %1545 = vmatpush1.msra.mxu0 0.0
    %1546 = vmatprep.subr.mxu0 0.0
    %1547 = vmatpush1.msra.mxu0 0.0
    %1548 = vmatprep.subr.mxu0 0.0
    %1549 = vmatpush1.msra.mxu0 0.0
    %1550 = vmatprep.subr.mxu0 0.0
    %1551 = vmatpush1.msra.mxu0 0.0
    %1552 = vmatprep.subr.mxu0 0.0
    %1553 = vmatpush1.msra.mxu0 0.0
    %1554 = vmatprep.subr.mxu0 0.0
    %1555 = vmatpush1.msra.mxu0 0.0
    %1556 = vmatprep.subr.mxu0 0.0
    %1557 = vmatpush1.msra.mxu0 0.0
    %1558 = vmatprep.subr.mxu0 0.0
    %1559 = vmatpush1.msra.mxu0 0.0
    %1560 = vmatprep.subr.mxu0 0.0
    %1561 = vmatpush1.msra.mxu0 0.0
    %1562 = vmatprep.subr.mxu0 0.0
    %1563 = vmatpush1.msra.mxu0 0.0
    %1564 = vmatprep.subr.mxu0 0.0
    %1565 = vmatpush1.msra.mxu0 0.0
    %1566 = vmatprep.subr.mxu0 0.0
    %1567 = vmatpush1.msra.mxu0 0.0
    %1568 = vmatprep.mubr.f32.mxu0 0.0
    %1569 = vmatmul.mubr.f32.gmra.mrb[0].mxu0 %v1503
    %v1570 = vpop.f32.mrb[0].mxu0
    %v1571 = vadd.f32 %v82, %v1570
    %v1572 = vpop.f32.mrb[0].mxu0
    %1573 = vdwg.mxu0
    %vm1574 = vcmp.gt.f32.partialorder %v1571, 20.0
    %v1575 = vmin.f32 %v1571, 20.0
    %v1576 = vmul.f32 %v1575, 1.442695
    %v1577 = vpow.pop %v1576
    %v1578 = vadd.f32 %v1577, 1.0
    %v1579 = vlog2.pop %v1578
    %v1580 = vmul.f32 %v1579, 0.6931472
    %v1581 = vmul.f32 -0.5, %v1577
    %v1582 = vadd.f32 %v1581, 1.0
    %v1583 = vmul.f32 %v1582, %v1577
    %v1584 = vand.u32 2147483647, %v1577
    %vm1585 = vcmp.lt.f32.partialorder %v1584, 0.0004427343
    %v1586 = vsel %vm1585, %v1583, %v1580
    %v1587 = vsel %vm1574, %v1571, %v1586
    %v1588 = vlaneseq
    %v1589 = vand.u32 %v1588, 127
    %vm1590 = vcmp.lt.s32.totalorder %v1589, 4
    %vm1591 = vcmp.lt.s32.totalorder %v1589, 8
    %v1592 = vsel %vm1591, %v1587, 0.0
    %v1593 = vsel %vm1590, %v1571, %v1592
    %1594 = vst [vmem:[#allocation5] sm:$0xff] %v1593
    // Predicated region
    $region30: #{tpu_custom_call.1} parent=1 // pred_check
      _
    $region31: #{tpu_custom_call.1} parent=1 // pred_check_branch
      %1596 = sbr.rel (0) target = $region33
    $region32: #{tpu_custom_call.1} parent=1 // pred_region
      %s1598 = ssub.s32 128, 128
      %1599 = vsyncadd [#allocation4], %s1598
      %s1601 = sshll.u32 [#allocation5], 4
      %s1602 = int_to_ptr.vmem [resolvable:$true] %s1601
      %1604 = dma.vmem_to_hbm [thread:$0]  %s1602, 128, %s6, [#allocation4]
    $region33: #{tpu_custom_call.1} parent=1 // pred_fallthru
      _
    // Predicated region
    $region34: #{tpu_custom_call.1} parent=1 // pred_check
      _
    $region35: #{tpu_custom_call.1} parent=1 // pred_check_branch
      %1606 = sbr.rel (0) target = $region37
    $region36: #{tpu_custom_call.1} parent=1 // pred_region
      %1607 = dma.done [#allocation4], 128
    $region37: #{tpu_custom_call.1} parent=1 // pred_fallthru
      _
    %1608 = vsyncpa [#allocation3], 1
    %1609 = vsyncpa [#allocation4], 1

</llo_original>
